<compile_context>
chip_gen: v6e
topology: v6e:2x2x1
jax: 0.10.0
libtpu: 0.0.40
codegen_flags: <defaults>
</compile_context>

<pallas_src>
import functools

import jax
import jax.numpy as jnp
from jax import lax
from jax.experimental import pallas as pl
from jax.experimental.pallas import tpu as pltpu


def _attention_kernel(q_ref, k_ref, v_ref,
                      wq_ref, bq_ref, wk_ref, bk_ref, wv_ref, bv_ref,
                      wm_ref, bm_ref,
                      o_ref,
                      *, n_heads, head_dim, batch_block, q_len, kv_len):
    C = n_heads * head_dim
    bf16 = jnp.bfloat16
    f32 = jnp.float32

    # ---- 1x1-conv projections, flattened over (batch_block * length) rows so
    #      the MXU sees a sublane-dense LHS.  bf16 operands, f32 accumulation,
    #      bias added in f32. ----
    q_flat = q_ref[...].reshape(batch_block * q_len, C).astype(bf16)
    k_flat = k_ref[...].reshape(batch_block * kv_len, C).astype(bf16)
    v_flat = v_ref[...].reshape(batch_block * kv_len, C).astype(bf16)

    q = jnp.dot(q_flat, wq_ref[...], preferred_element_type=f32) + bq_ref[...]
    k = jnp.dot(k_flat, wk_ref[...], preferred_element_type=f32) + bk_ref[...]
    v = jnp.dot(v_flat, wv_ref[...], preferred_element_type=f32) + bv_ref[...]

    scale = 1.0 / (head_dim ** 0.5)
    nt_dims = (((1,), (1,)), ((), ()))     # contract last dims: q @ k^T, no transpose

    wm_all = wm_ref[...]                   # (C, C) bf16, loaded once
    wm_heads = [wm_all[h * head_dim:(h + 1) * head_dim, :] for h in range(n_heads)]
    bm = bm_ref[...]                       # (1, C) f32

    for b in range(batch_block):           # static, small
        qb = q[b * q_len:(b + 1) * q_len, :]
        kb = k[b * kv_len:(b + 1) * kv_len, :]
        vb = v[b * kv_len:(b + 1) * kv_len, :]

        acc = jnp.zeros((q_len, C), f32)   # merged output accumulator (pre-bias)
        for h in range(n_heads):           # static, small
            lo = h * head_dim
            # scale folded into the small (N, d) q slice (f32) before bf16 cast
            qh = (qb[:, lo:lo + head_dim] * scale).astype(bf16)
            kh = kb[:, lo:lo + head_dim].astype(bf16)
            vh = vb[:, lo:lo + head_dim].astype(bf16)

            s = lax.dot_general(qh, kh, nt_dims, preferred_element_type=f32)  # (N, M)
            s = s - jnp.max(s, axis=-1, keepdims=True)
            p = jnp.exp(s)                                                    # f32
            p = p * pl.reciprocal(jnp.sum(p, axis=-1, keepdims=True), approx=True)

            head_out = jnp.dot(p.astype(bf16), vh, preferred_element_type=f32)  # (N, d)
            # fold merge directly: attn[:, lo:lo+d] @ wm[lo:lo+d, :]  (no concatenate)
            acc = acc + jnp.dot(head_out.astype(bf16), wm_heads[h],
                                preferred_element_type=f32)

        o_ref[b] = (acc + bm).astype(o_ref.dtype)


def attention_forward(query, key, value, params, *, n_heads, batch_block=None):
    """query/key/value: (B, d_model, L) float32 (PyTorch NCL layout).

    Returns (B, d_model, L_q), matching the PyTorch module's forward (bf16 MXU
    operands, f32 accumulation).
    """
    B, d_model, N = query.shape
    M = key.shape[2]
    assert d_model % n_heads == 0
    head_dim = d_model // n_heads
    C = d_model

    if batch_block is None:
        # flatten enough batches per grid step to densify the projection's
        # sublane dimension (target ~128 rows), while dividing B evenly.
        bb = min(B, max(1, 128 // max(N, 1)))
        while B % bb:
            bb -= 1
        batch_block = bb
    assert B % batch_block == 0

    # channels-last for the kernel
    q_nlc = jnp.transpose(query, (0, 2, 1))   # (B, N, C)
    k_nlc = jnp.transpose(key, (0, 2, 1))     # (B, M, C)
    v_nlc = jnp.transpose(value, (0, 2, 1))   # (B, M, C)

    # kernel channel c' = h*head_dim + d  <->  torch channel d*n_heads + h
    perm = jnp.arange(d_model).reshape(head_dim, n_heads).T.reshape(-1)

    bf16 = jnp.bfloat16
    # permute projection OUTPUT channels, merge INPUT channels; pre-transpose to
    # (C_in, C_out); weights in bf16 (MXU operands), biases stay f32.
    wq_t = params["wq"][perm, :].T.astype(bf16)
    wk_t = params["wk"][perm, :].T.astype(bf16)
    wv_t = params["wv"][perm, :].T.astype(bf16)
    wm_t = params["wm"][:, perm].T.astype(bf16)
    bq_p = params["bq"][perm][None, :].astype(jnp.float32)
    bk_p = params["bk"][perm][None, :].astype(jnp.float32)
    bv_p = params["bv"][perm][None, :].astype(jnp.float32)
    bm_p = params["bm"][None, :].astype(jnp.float32)

    kernel = functools.partial(_attention_kernel, n_heads=n_heads,
                               head_dim=head_dim, batch_block=batch_block,
                               q_len=N, kv_len=M)

    w_spec = pl.BlockSpec((C, C), lambda i: (0, 0))
    b_spec = pl.BlockSpec((1, C), lambda i: (0, 0))

    out_nlc = pl.pallas_call(
        kernel,
        out_shape=jax.ShapeDtypeStruct((B, N, C), jnp.float32),
        grid=(B // batch_block,),
        in_specs=[
            pl.BlockSpec((batch_block, N, C), lambda i: (i, 0, 0)),   # query
            pl.BlockSpec((batch_block, M, C), lambda i: (i, 0, 0)),   # key
            pl.BlockSpec((batch_block, M, C), lambda i: (i, 0, 0)),   # value
            w_spec, b_spec,                                           # q-proj
            w_spec, b_spec,                                           # k-proj
            w_spec, b_spec,                                           # v-proj
            w_spec, b_spec,                                           # merge
        ],
        out_specs=pl.BlockSpec((batch_block, N, C), lambda i: (i, 0, 0)),
        compiler_params=pltpu.CompilerParams(
            dimension_semantics=("parallel",)),     # batch blocks are independent
    )(q_nlc, k_nlc, v_nlc,
      wq_t, bq_p, wk_t, bk_p, wv_t, bv_p, wm_t, bm_p)

    return jnp.transpose(out_nlc, (0, 2, 1))     # back to (B, d_model, N)


def _reference_forward(query, key, value, params, *, n_heads):
    """Pure-JAX f32 replica of the PyTorch forward (for correctness checking)."""
    d_model = query.shape[1]
    head_dim = d_model // n_heads
    b = query.shape[0]

    def conv1x1(x, w, bias):        # x: (B, C, L)
        return jnp.einsum('oc,bcl->bol', w, x) + bias[None, :, None]

    q = conv1x1(query, params["wq"], params["bq"]).reshape(b, head_dim, n_heads, -1)
    k = conv1x1(key, params["wk"], params["bk"]).reshape(b, head_dim, n_heads, -1)
    v = conv1x1(value, params["wv"], params["bv"]).reshape(b, head_dim, n_heads, -1)

    scores = jnp.einsum('bdhn,bdhm->bhnm', q, k) / (head_dim ** 0.5)
    attn_w = jax.nn.softmax(scores, axis=-1)
    attn = jnp.einsum('bhnm,bdhm->bdhn', attn_w, v)
    attn = attn.reshape(b, head_dim * n_heads, -1)
    return conv1x1(attn, params["wm"], params["bm"])


if __name__ == "__main__":
    # small shapes consistent with the module
    B = 2
    n_heads = 4
    d_model = 32          # head_dim = 8
    N = 16                # query length
    M = 16                # key/value length

    key0 = jax.random.PRNGKey(0)
    ks = jax.random.split(key0, 12)

    def winit(k):  # Conv1d(d_model, d_model, 1) weight -> (out, in)
        return jax.random.normal(k, (d_model, d_model), jnp.float32) * 0.1

    def binit(k):
        return jax.random.normal(k, (d_model,), jnp.float32) * 0.05

    params = {
        "wq": winit(ks[0]), "bq": binit(ks[1]),
        "wk": winit(ks[2]), "bk": binit(ks[3]),
        "wv": winit(ks[4]), "bv": binit(ks[5]),
        "wm": winit(ks[6]), "bm": binit(ks[7]),
    }

    query = jax.random.normal(ks[8], (B, d_model, N), jnp.float32)
    key_t = jax.random.normal(ks[9], (B, d_model, M), jnp.float32)
    value = jax.random.normal(ks[10], (B, d_model, M), jnp.float32)

    # default batch_block (flattens both batches into one grid step)
    out = attention_forward(query, key_t, value, params, n_heads=n_heads)
    out = jax.block_until_ready(out)

    # explicit batch_block=1 exercises the grid=(B,) per-batch path too
    out_b1 = attention_forward(query, key_t, value, params, n_heads=n_heads,
                               batch_block=1)
    out_b1 = jax.block_until_ready(out_b1)

    ref = _reference_forward(query, key_t, value, params, n_heads=n_heads)

    assert out.shape == (B, d_model, N)
    # bf16 MXU operands + approx softmax reciprocal -> relaxed tolerance vs f32 ref
    assert jnp.allclose(out, ref, atol=5e-2, rtol=5e-2), "mismatch vs reference"
    assert jnp.allclose(out_b1, ref, atol=5e-2, rtol=5e-2), "mismatch vs reference (bb=1)"
    assert jnp.allclose(out, out_b1, atol=1e-3, rtol=1e-3), "tiling mismatch"

    print("KERNEL_OK")
</pallas_src>

<mosaic_0001>
module attributes {stable_mosaic.version = 11 : i64} {
  func.func @_attention_kernel(%arg0: i32, %arg1: memref<2x16x32xf32, #tpu.memory_space<vmem>>, %arg2: memref<2x16x32xf32, #tpu.memory_space<vmem>>, %arg3: memref<2x16x32xf32, #tpu.memory_space<vmem>>, %arg4: memref<32x32xbf16, #tpu.memory_space<vmem>>, %arg5: memref<1x32xf32, #tpu.memory_space<vmem>>, %arg6: memref<32x32xbf16, #tpu.memory_space<vmem>>, %arg7: memref<1x32xf32, #tpu.memory_space<vmem>>, %arg8: memref<32x32xbf16, #tpu.memory_space<vmem>>, %arg9: memref<1x32xf32, #tpu.memory_space<vmem>>, %arg10: memref<32x32xbf16, #tpu.memory_space<vmem>>, %arg11: memref<1x32xf32, #tpu.memory_space<vmem>>, %arg12: memref<2x16x32xf32, #tpu.memory_space<vmem>>) attributes {dimension_semantics = [#tpu.dimension_semantics<parallel>], iteration_bounds = array<i64: 1>, scalar_prefetch = 0 : i64, scratch_operands = 0 : i64, tpu.core_type = #tpu.core_type<tc>, window_params = [{transform_indices = @transform_0, window_bounds = array<i64: 2, 16, 32>}, {transform_indices = @transform_1, window_bounds = array<i64: 2, 16, 32>}, {transform_indices = @transform_2, window_bounds = array<i64: 2, 16, 32>}, {pipeline_mode = #tpu.pipeline_mode<synchronous>, transform_indices = @transform_3, window_bounds = array<i64: 32, 32>}, {pipeline_mode = #tpu.pipeline_mode<synchronous>, transform_indices = @transform_4, window_bounds = array<i64: 1, 32>}, {pipeline_mode = #tpu.pipeline_mode<synchronous>, transform_indices = @transform_5, window_bounds = array<i64: 32, 32>}, {pipeline_mode = #tpu.pipeline_mode<synchronous>, transform_indices = @transform_6, window_bounds = array<i64: 1, 32>}, {pipeline_mode = #tpu.pipeline_mode<synchronous>, transform_indices = @transform_7, window_bounds = array<i64: 32, 32>}, {pipeline_mode = #tpu.pipeline_mode<synchronous>, transform_indices = @transform_8, window_bounds = array<i64: 1, 32>}, {pipeline_mode = #tpu.pipeline_mode<synchronous>, transform_indices = @transform_9, window_bounds = array<i64: 32, 32>}, {pipeline_mode = #tpu.pipeline_mode<synchronous>, transform_indices = @transform_10, window_bounds = array<i64: 1, 32>}, {transform_indices = @transform_11, window_bounds = array<i64: 2, 16, 32>}]} {
    %c0 = arith.constant 0 : index
    %c0_0 = arith.constant 0 : index
    %c0_1 = arith.constant 0 : index
    %0 = vector.load %arg1[%c0, %c0_0, %c0_1] : memref<2x16x32xf32, #tpu.memory_space<vmem>>, vector<2x16x32xf32>
    %1 = vector.shape_cast %0 : vector<2x16x32xf32> to vector<32x32xf32>
    %2 = arith.truncf %1 : vector<32x32xf32> to vector<32x32xbf16>
    %c0_2 = arith.constant 0 : index
    %c0_3 = arith.constant 0 : index
    %c0_4 = arith.constant 0 : index
    %3 = vector.load %arg2[%c0_2, %c0_3, %c0_4] : memref<2x16x32xf32, #tpu.memory_space<vmem>>, vector<2x16x32xf32>
    %4 = vector.shape_cast %3 : vector<2x16x32xf32> to vector<32x32xf32>
    %5 = arith.truncf %4 : vector<32x32xf32> to vector<32x32xbf16>
    %c0_5 = arith.constant 0 : index
    %c0_6 = arith.constant 0 : index
    %c0_7 = arith.constant 0 : index
    %6 = vector.load %arg3[%c0_5, %c0_6, %c0_7] : memref<2x16x32xf32, #tpu.memory_space<vmem>>, vector<2x16x32xf32>
    %7 = vector.shape_cast %6 : vector<2x16x32xf32> to vector<32x32xf32>
    %8 = arith.truncf %7 : vector<32x32xf32> to vector<32x32xbf16>
    %c0_8 = arith.constant 0 : index
    %c0_9 = arith.constant 0 : index
    %9 = vector.load %arg4[%c0_8, %c0_9] : memref<32x32xbf16, #tpu.memory_space<vmem>>, vector<32x32xbf16>
    %cst = arith.constant dense<0.000000e+00> : vector<32x32xf32>
    %10 = tpu.matmul %2, %9, %cst {dimension_numbers = #tpu.dot_dimension_numbers<[1], [0], [0], [1], [0, 0, 1, 1], [], []>} : vector<32x32xbf16>, vector<32x32xbf16>, vector<32x32xf32> -> vector<32x32xf32>
    %c0_10 = arith.constant 0 : index
    %c0_11 = arith.constant 0 : index
    %11 = vector.load %arg5[%c0_10, %c0_11] : memref<1x32xf32, #tpu.memory_space<vmem>>, vector<1x32xf32>
    %12 = vector.broadcast %11 : vector<1x32xf32> to vector<32x32xf32>
    %13 = arith.addf %10, %12 : vector<32x32xf32>
    %c0_12 = arith.constant 0 : index
    %c0_13 = arith.constant 0 : index
    %14 = vector.load %arg6[%c0_12, %c0_13] : memref<32x32xbf16, #tpu.memory_space<vmem>>, vector<32x32xbf16>
    %cst_14 = arith.constant dense<0.000000e+00> : vector<32x32xf32>
    %15 = tpu.matmul %5, %14, %cst_14 {dimension_numbers = #tpu.dot_dimension_numbers<[1], [0], [0], [1], [0, 0, 1, 1], [], []>} : vector<32x32xbf16>, vector<32x32xbf16>, vector<32x32xf32> -> vector<32x32xf32>
    %c0_15 = arith.constant 0 : index
    %c0_16 = arith.constant 0 : index
    %16 = vector.load %arg7[%c0_15, %c0_16] : memref<1x32xf32, #tpu.memory_space<vmem>>, vector<1x32xf32>
    %17 = vector.broadcast %16 : vector<1x32xf32> to vector<32x32xf32>
    %18 = arith.addf %15, %17 : vector<32x32xf32>
    %c0_17 = arith.constant 0 : index
    %c0_18 = arith.constant 0 : index
    %19 = vector.load %arg8[%c0_17, %c0_18] : memref<32x32xbf16, #tpu.memory_space<vmem>>, vector<32x32xbf16>
    %cst_19 = arith.constant dense<0.000000e+00> : vector<32x32xf32>
    %20 = tpu.matmul %8, %19, %cst_19 {dimension_numbers = #tpu.dot_dimension_numbers<[1], [0], [0], [1], [0, 0, 1, 1], [], []>} : vector<32x32xbf16>, vector<32x32xbf16>, vector<32x32xf32> -> vector<32x32xf32>
    %c0_20 = arith.constant 0 : index
    %c0_21 = arith.constant 0 : index
    %21 = vector.load %arg9[%c0_20, %c0_21] : memref<1x32xf32, #tpu.memory_space<vmem>>, vector<1x32xf32>
    %22 = vector.broadcast %21 : vector<1x32xf32> to vector<32x32xf32>
    %23 = arith.addf %20, %22 : vector<32x32xf32>
    %c0_22 = arith.constant 0 : index
    %c0_23 = arith.constant 0 : index
    %24 = vector.load %arg10[%c0_22, %c0_23] : memref<32x32xbf16, #tpu.memory_space<vmem>>, vector<32x32xbf16>
    %25 = vector.extract_strided_slice %24 {offsets = [0, 0], sizes = [8, 32], strides = [1, 1]} : vector<32x32xbf16> to vector<8x32xbf16>
    %26 = vector.extract_strided_slice %24 {offsets = [8, 0], sizes = [8, 32], strides = [1, 1]} : vector<32x32xbf16> to vector<8x32xbf16>
    %27 = vector.extract_strided_slice %24 {offsets = [16, 0], sizes = [8, 32], strides = [1, 1]} : vector<32x32xbf16> to vector<8x32xbf16>
    %28 = vector.extract_strided_slice %24 {offsets = [24, 0], sizes = [8, 32], strides = [1, 1]} : vector<32x32xbf16> to vector<8x32xbf16>
    %c0_24 = arith.constant 0 : index
    %c0_25 = arith.constant 0 : index
    %29 = vector.load %arg11[%c0_24, %c0_25] : memref<1x32xf32, #tpu.memory_space<vmem>>, vector<1x32xf32>
    %30 = vector.extract_strided_slice %13 {offsets = [0, 0], sizes = [16, 32], strides = [1, 1]} : vector<32x32xf32> to vector<16x32xf32>
    %31 = vector.extract_strided_slice %18 {offsets = [0, 0], sizes = [16, 32], strides = [1, 1]} : vector<32x32xf32> to vector<16x32xf32>
    %32 = vector.extract_strided_slice %23 {offsets = [0, 0], sizes = [16, 32], strides = [1, 1]} : vector<32x32xf32> to vector<16x32xf32>
    %cst_26 = arith.constant 0.000000e+00 : f32
    %33 = vector.broadcast %cst_26 : f32 to vector<16x32xf32>
    %34 = vector.extract_strided_slice %30 {offsets = [0, 0], sizes = [16, 8], strides = [1, 1]} : vector<16x32xf32> to vector<16x8xf32>
    %cst_27 = arith.constant 0.353553385 : f32
    %35 = vector.broadcast %cst_27 : f32 to vector<16x8xf32>
    %36 = arith.mulf %34, %35 : vector<16x8xf32>
    %37 = arith.truncf %36 : vector<16x8xf32> to vector<16x8xbf16>
    %38 = vector.extract_strided_slice %31 {offsets = [0, 0], sizes = [16, 8], strides = [1, 1]} : vector<16x32xf32> to vector<16x8xf32>
    %39 = arith.truncf %38 : vector<16x8xf32> to vector<16x8xbf16>
    %40 = vector.extract_strided_slice %32 {offsets = [0, 0], sizes = [16, 8], strides = [1, 1]} : vector<16x32xf32> to vector<16x8xf32>
    %41 = arith.truncf %40 : vector<16x8xf32> to vector<16x8xbf16>
    %cst_28 = arith.constant dense<0.000000e+00> : vector<16x16xf32>
    %42 = tpu.matmul %37, %39, %cst_28 {dimension_numbers = #tpu.dot_dimension_numbers<[1], [1], [0], [0], [0, 0, 1, 0], [], []>} : vector<16x8xbf16>, vector<16x8xbf16>, vector<16x16xf32> -> vector<16x16xf32>
    %cst_29 = arith.constant dense<0xFF800000> : vector<16xf32>
    %43 = vector.multi_reduction <maximumf>, %42, %cst_29 [1] : vector<16x16xf32> to vector<16xf32>
    %44 = vector.shape_cast %43 : vector<16xf32> to vector<16x1xf32>
    %45 = vector.broadcast %44 : vector<16x1xf32> to vector<16x16xf32>
    %46 = arith.subf %42, %45 : vector<16x16xf32>
    %47 = math.exp %46 : vector<16x16xf32>
    %cst_30 = arith.constant dense<0.000000e+00> : vector<16xf32>
    %48 = vector.multi_reduction <add>, %47, %cst_30 [1] : vector<16x16xf32> to vector<16xf32>
    %49 = vector.shape_cast %48 : vector<16xf32> to vector<16x1xf32>
    %50 = tpu.reciprocal %49 {approx = true} : vector<16x1xf32> -> vector<16x1xf32>
    %51 = vector.broadcast %50 : vector<16x1xf32> to vector<16x16xf32>
    %52 = arith.mulf %47, %51 : vector<16x16xf32>
    %53 = arith.truncf %52 : vector<16x16xf32> to vector<16x16xbf16>
    %cst_31 = arith.constant dense<0.000000e+00> : vector<16x8xf32>
    %54 = tpu.matmul %53, %41, %cst_31 {dimension_numbers = #tpu.dot_dimension_numbers<[1], [0], [0], [1], [0, 0, 1, 1], [], []>} : vector<16x16xbf16>, vector<16x8xbf16>, vector<16x8xf32> -> vector<16x8xf32>
    %55 = arith.truncf %54 : vector<16x8xf32> to vector<16x8xbf16>
    %cst_32 = arith.constant dense<0.000000e+00> : vector<16x32xf32>
    %56 = tpu.matmul %55, %25, %cst_32 {dimension_numbers = #tpu.dot_dimension_numbers<[1], [0], [0], [1], [0, 0, 1, 1], [], []>} : vector<16x8xbf16>, vector<8x32xbf16>, vector<16x32xf32> -> vector<16x32xf32>
    %57 = arith.addf %33, %56 : vector<16x32xf32>
    %58 = vector.extract_strided_slice %30 {offsets = [0, 8], sizes = [16, 8], strides = [1, 1]} : vector<16x32xf32> to vector<16x8xf32>
    %cst_33 = arith.constant 0.353553385 : f32
    %59 = vector.broadcast %cst_33 : f32 to vector<16x8xf32>
    %60 = arith.mulf %58, %59 : vector<16x8xf32>
    %61 = arith.truncf %60 : vector<16x8xf32> to vector<16x8xbf16>
    %62 = vector.extract_strided_slice %31 {offsets = [0, 8], sizes = [16, 8], strides = [1, 1]} : vector<16x32xf32> to vector<16x8xf32>
    %63 = arith.truncf %62 : vector<16x8xf32> to vector<16x8xbf16>
    %64 = vector.extract_strided_slice %32 {offsets = [0, 8], sizes = [16, 8], strides = [1, 1]} : vector<16x32xf32> to vector<16x8xf32>
    %65 = arith.truncf %64 : vector<16x8xf32> to vector<16x8xbf16>
    %cst_34 = arith.constant dense<0.000000e+00> : vector<16x16xf32>
    %66 = tpu.matmul %61, %63, %cst_34 {dimension_numbers = #tpu.dot_dimension_numbers<[1], [1], [0], [0], [0, 0, 1, 0], [], []>} : vector<16x8xbf16>, vector<16x8xbf16>, vector<16x16xf32> -> vector<16x16xf32>
    %cst_35 = arith.constant dense<0xFF800000> : vector<16xf32>
    %67 = vector.multi_reduction <maximumf>, %66, %cst_35 [1] : vector<16x16xf32> to vector<16xf32>
    %68 = vector.shape_cast %67 : vector<16xf32> to vector<16x1xf32>
    %69 = vector.broadcast %68 : vector<16x1xf32> to vector<16x16xf32>
    %70 = arith.subf %66, %69 : vector<16x16xf32>
    %71 = math.exp %70 : vector<16x16xf32>
    %cst_36 = arith.constant dense<0.000000e+00> : vector<16xf32>
    %72 = vector.multi_reduction <add>, %71, %cst_36 [1] : vector<16x16xf32> to vector<16xf32>
    %73 = vector.shape_cast %72 : vector<16xf32> to vector<16x1xf32>
    %74 = tpu.reciprocal %73 {approx = true} : vector<16x1xf32> -> vector<16x1xf32>
    %75 = vector.broadcast %74 : vector<16x1xf32> to vector<16x16xf32>
    %76 = arith.mulf %71, %75 : vector<16x16xf32>
    %77 = arith.truncf %76 : vector<16x16xf32> to vector<16x16xbf16>
    %cst_37 = arith.constant dense<0.000000e+00> : vector<16x8xf32>
    %78 = tpu.matmul %77, %65, %cst_37 {dimension_numbers = #tpu.dot_dimension_numbers<[1], [0], [0], [1], [0, 0, 1, 1], [], []>} : vector<16x16xbf16>, vector<16x8xbf16>, vector<16x8xf32> -> vector<16x8xf32>
    %79 = arith.truncf %78 : vector<16x8xf32> to vector<16x8xbf16>
    %cst_38 = arith.constant dense<0.000000e+00> : vector<16x32xf32>
    %80 = tpu.matmul %79, %26, %cst_38 {dimension_numbers = #tpu.dot_dimension_numbers<[1], [0], [0], [1], [0, 0, 1, 1], [], []>} : vector<16x8xbf16>, vector<8x32xbf16>, vector<16x32xf32> -> vector<16x32xf32>
    %81 = arith.addf %57, %80 : vector<16x32xf32>
    %82 = vector.extract_strided_slice %30 {offsets = [0, 16], sizes = [16, 8], strides = [1, 1]} : vector<16x32xf32> to vector<16x8xf32>
    %cst_39 = arith.constant 0.353553385 : f32
    %83 = vector.broadcast %cst_39 : f32 to vector<16x8xf32>
    %84 = arith.mulf %82, %83 : vector<16x8xf32>
    %85 = arith.truncf %84 : vector<16x8xf32> to vector<16x8xbf16>
    %86 = vector.extract_strided_slice %31 {offsets = [0, 16], sizes = [16, 8], strides = [1, 1]} : vector<16x32xf32> to vector<16x8xf32>
    %87 = arith.truncf %86 : vector<16x8xf32> to vector<16x8xbf16>
    %88 = vector.extract_strided_slice %32 {offsets = [0, 16], sizes = [16, 8], strides = [1, 1]} : vector<16x32xf32> to vector<16x8xf32>
    %89 = arith.truncf %88 : vector<16x8xf32> to vector<16x8xbf16>
    %cst_40 = arith.constant dense<0.000000e+00> : vector<16x16xf32>
    %90 = tpu.matmul %85, %87, %cst_40 {dimension_numbers = #tpu.dot_dimension_numbers<[1], [1], [0], [0], [0, 0, 1, 0], [], []>} : vector<16x8xbf16>, vector<16x8xbf16>, vector<16x16xf32> -> vector<16x16xf32>
    %cst_41 = arith.constant dense<0xFF800000> : vector<16xf32>
    %91 = vector.multi_reduction <maximumf>, %90, %cst_41 [1] : vector<16x16xf32> to vector<16xf32>
    %92 = vector.shape_cast %91 : vector<16xf32> to vector<16x1xf32>
    %93 = vector.broadcast %92 : vector<16x1xf32> to vector<16x16xf32>
    %94 = arith.subf %90, %93 : vector<16x16xf32>
    %95 = math.exp %94 : vector<16x16xf32>
    %cst_42 = arith.constant dense<0.000000e+00> : vector<16xf32>
    %96 = vector.multi_reduction <add>, %95, %cst_42 [1] : vector<16x16xf32> to vector<16xf32>
    %97 = vector.shape_cast %96 : vector<16xf32> to vector<16x1xf32>
    %98 = tpu.reciprocal %97 {approx = true} : vector<16x1xf32> -> vector<16x1xf32>
    %99 = vector.broadcast %98 : vector<16x1xf32> to vector<16x16xf32>
    %100 = arith.mulf %95, %99 : vector<16x16xf32>
    %101 = arith.truncf %100 : vector<16x16xf32> to vector<16x16xbf16>
    %cst_43 = arith.constant dense<0.000000e+00> : vector<16x8xf32>
    %102 = tpu.matmul %101, %89, %cst_43 {dimension_numbers = #tpu.dot_dimension_numbers<[1], [0], [0], [1], [0, 0, 1, 1], [], []>} : vector<16x16xbf16>, vector<16x8xbf16>, vector<16x8xf32> -> vector<16x8xf32>
    %103 = arith.truncf %102 : vector<16x8xf32> to vector<16x8xbf16>
    %cst_44 = arith.constant dense<0.000000e+00> : vector<16x32xf32>
    %104 = tpu.matmul %103, %27, %cst_44 {dimension_numbers = #tpu.dot_dimension_numbers<[1], [0], [0], [1], [0, 0, 1, 1], [], []>} : vector<16x8xbf16>, vector<8x32xbf16>, vector<16x32xf32> -> vector<16x32xf32>
    %105 = arith.addf %81, %104 : vector<16x32xf32>
    %106 = vector.extract_strided_slice %30 {offsets = [0, 24], sizes = [16, 8], strides = [1, 1]} : vector<16x32xf32> to vector<16x8xf32>
    %cst_45 = arith.constant 0.353553385 : f32
    %107 = vector.broadcast %cst_45 : f32 to vector<16x8xf32>
    %108 = arith.mulf %106, %107 : vector<16x8xf32>
    %109 = arith.truncf %108 : vector<16x8xf32> to vector<16x8xbf16>
    %110 = vector.extract_strided_slice %31 {offsets = [0, 24], sizes = [16, 8], strides = [1, 1]} : vector<16x32xf32> to vector<16x8xf32>
    %111 = arith.truncf %110 : vector<16x8xf32> to vector<16x8xbf16>
    %112 = vector.extract_strided_slice %32 {offsets = [0, 24], sizes = [16, 8], strides = [1, 1]} : vector<16x32xf32> to vector<16x8xf32>
    %113 = arith.truncf %112 : vector<16x8xf32> to vector<16x8xbf16>
    %cst_46 = arith.constant dense<0.000000e+00> : vector<16x16xf32>
    %114 = tpu.matmul %109, %111, %cst_46 {dimension_numbers = #tpu.dot_dimension_numbers<[1], [1], [0], [0], [0, 0, 1, 0], [], []>} : vector<16x8xbf16>, vector<16x8xbf16>, vector<16x16xf32> -> vector<16x16xf32>
    %cst_47 = arith.constant dense<0xFF800000> : vector<16xf32>
    %115 = vector.multi_reduction <maximumf>, %114, %cst_47 [1] : vector<16x16xf32> to vector<16xf32>
    %116 = vector.shape_cast %115 : vector<16xf32> to vector<16x1xf32>
    %117 = vector.broadcast %116 : vector<16x1xf32> to vector<16x16xf32>
    %118 = arith.subf %114, %117 : vector<16x16xf32>
    %119 = math.exp %118 : vector<16x16xf32>
    %cst_48 = arith.constant dense<0.000000e+00> : vector<16xf32>
    %120 = vector.multi_reduction <add>, %119, %cst_48 [1] : vector<16x16xf32> to vector<16xf32>
    %121 = vector.shape_cast %120 : vector<16xf32> to vector<16x1xf32>
    %122 = tpu.reciprocal %121 {approx = true} : vector<16x1xf32> -> vector<16x1xf32>
    %123 = vector.broadcast %122 : vector<16x1xf32> to vector<16x16xf32>
    %124 = arith.mulf %119, %123 : vector<16x16xf32>
    %125 = arith.truncf %124 : vector<16x16xf32> to vector<16x16xbf16>
    %cst_49 = arith.constant dense<0.000000e+00> : vector<16x8xf32>
    %126 = tpu.matmul %125, %113, %cst_49 {dimension_numbers = #tpu.dot_dimension_numbers<[1], [0], [0], [1], [0, 0, 1, 1], [], []>} : vector<16x16xbf16>, vector<16x8xbf16>, vector<16x8xf32> -> vector<16x8xf32>
    %127 = arith.truncf %126 : vector<16x8xf32> to vector<16x8xbf16>
    %cst_50 = arith.constant dense<0.000000e+00> : vector<16x32xf32>
    %128 = tpu.matmul %127, %28, %cst_50 {dimension_numbers = #tpu.dot_dimension_numbers<[1], [0], [0], [1], [0, 0, 1, 1], [], []>} : vector<16x8xbf16>, vector<8x32xbf16>, vector<16x32xf32> -> vector<16x32xf32>
    %129 = arith.addf %105, %128 : vector<16x32xf32>
    %130 = vector.broadcast %29 : vector<1x32xf32> to vector<16x32xf32>
    %131 = arith.addf %129, %130 : vector<16x32xf32>
    %c0_51 = arith.constant 0 : index
    %c0_52 = arith.constant 0 : index
    %c0_53 = arith.constant 0 : index
    %132 = vector.load %arg12[%c0_51, %c0_52, %c0_53] : memref<2x16x32xf32, #tpu.memory_space<vmem>>, vector<1x16x32xf32>
    %133 = vector.shape_cast %132 : vector<1x16x32xf32> to vector<16x32xf32>
    %134 = vector.shape_cast %131 : vector<16x32xf32> to vector<1x16x32xf32>
    tpu.vector_store %arg12[%c0_51, %c0_52, %c0_53], %134 {strides = array<i32>} : memref<2x16x32xf32, #tpu.memory_space<vmem>>, vector<1x16x32xf32>,
    %135 = vector.extract_strided_slice %13 {offsets = [16, 0], sizes = [16, 32], strides = [1, 1]} : vector<32x32xf32> to vector<16x32xf32>
    %136 = vector.extract_strided_slice %18 {offsets = [16, 0], sizes = [16, 32], strides = [1, 1]} : vector<32x32xf32> to vector<16x32xf32>
    %137 = vector.extract_strided_slice %23 {offsets = [16, 0], sizes = [16, 32], strides = [1, 1]} : vector<32x32xf32> to vector<16x32xf32>
    %cst_54 = arith.constant 0.000000e+00 : f32
    %138 = vector.broadcast %cst_54 : f32 to vector<16x32xf32>
    %139 = vector.extract_strided_slice %135 {offsets = [0, 0], sizes = [16, 8], strides = [1, 1]} : vector<16x32xf32> to vector<16x8xf32>
    %cst_55 = arith.constant 0.353553385 : f32
    %140 = vector.broadcast %cst_55 : f32 to vector<16x8xf32>
    %141 = arith.mulf %139, %140 : vector<16x8xf32>
    %142 = arith.truncf %141 : vector<16x8xf32> to vector<16x8xbf16>
    %143 = vector.extract_strided_slice %136 {offsets = [0, 0], sizes = [16, 8], strides = [1, 1]} : vector<16x32xf32> to vector<16x8xf32>
    %144 = arith.truncf %143 : vector<16x8xf32> to vector<16x8xbf16>
    %145 = vector.extract_strided_slice %137 {offsets = [0, 0], sizes = [16, 8], strides = [1, 1]} : vector<16x32xf32> to vector<16x8xf32>
    %146 = arith.truncf %145 : vector<16x8xf32> to vector<16x8xbf16>
    %cst_56 = arith.constant dense<0.000000e+00> : vector<16x16xf32>
    %147 = tpu.matmul %142, %144, %cst_56 {dimension_numbers = #tpu.dot_dimension_numbers<[1], [1], [0], [0], [0, 0, 1, 0], [], []>} : vector<16x8xbf16>, vector<16x8xbf16>, vector<16x16xf32> -> vector<16x16xf32>
    %cst_57 = arith.constant dense<0xFF800000> : vector<16xf32>
    %148 = vector.multi_reduction <maximumf>, %147, %cst_57 [1] : vector<16x16xf32> to vector<16xf32>
    %149 = vector.shape_cast %148 : vector<16xf32> to vector<16x1xf32>
    %150 = vector.broadcast %149 : vector<16x1xf32> to vector<16x16xf32>
    %151 = arith.subf %147, %150 : vector<16x16xf32>
    %152 = math.exp %151 : vector<16x16xf32>
    %cst_58 = arith.constant dense<0.000000e+00> : vector<16xf32>
    %153 = vector.multi_reduction <add>, %152, %cst_58 [1] : vector<16x16xf32> to vector<16xf32>
    %154 = vector.shape_cast %153 : vector<16xf32> to vector<16x1xf32>
    %155 = tpu.reciprocal %154 {approx = true} : vector<16x1xf32> -> vector<16x1xf32>
    %156 = vector.broadcast %155 : vector<16x1xf32> to vector<16x16xf32>
    %157 = arith.mulf %152, %156 : vector<16x16xf32>
    %158 = arith.truncf %157 : vector<16x16xf32> to vector<16x16xbf16>
    %cst_59 = arith.constant dense<0.000000e+00> : vector<16x8xf32>
    %159 = tpu.matmul %158, %146, %cst_59 {dimension_numbers = #tpu.dot_dimension_numbers<[1], [0], [0], [1], [0, 0, 1, 1], [], []>} : vector<16x16xbf16>, vector<16x8xbf16>, vector<16x8xf32> -> vector<16x8xf32>
    %160 = arith.truncf %159 : vector<16x8xf32> to vector<16x8xbf16>
    %cst_60 = arith.constant dense<0.000000e+00> : vector<16x32xf32>
    %161 = tpu.matmul %160, %25, %cst_60 {dimension_numbers = #tpu.dot_dimension_numbers<[1], [0], [0], [1], [0, 0, 1, 1], [], []>} : vector<16x8xbf16>, vector<8x32xbf16>, vector<16x32xf32> -> vector<16x32xf32>
    %162 = arith.addf %138, %161 : vector<16x32xf32>
    %163 = vector.extract_strided_slice %135 {offsets = [0, 8], sizes = [16, 8], strides = [1, 1]} : vector<16x32xf32> to vector<16x8xf32>
    %cst_61 = arith.constant 0.353553385 : f32
    %164 = vector.broadcast %cst_61 : f32 to vector<16x8xf32>
    %165 = arith.mulf %163, %164 : vector<16x8xf32>
    %166 = arith.truncf %165 : vector<16x8xf32> to vector<16x8xbf16>
    %167 = vector.extract_strided_slice %136 {offsets = [0, 8], sizes = [16, 8], strides = [1, 1]} : vector<16x32xf32> to vector<16x8xf32>
    %168 = arith.truncf %167 : vector<16x8xf32> to vector<16x8xbf16>
    %169 = vector.extract_strided_slice %137 {offsets = [0, 8], sizes = [16, 8], strides = [1, 1]} : vector<16x32xf32> to vector<16x8xf32>
    %170 = arith.truncf %169 : vector<16x8xf32> to vector<16x8xbf16>
    %cst_62 = arith.constant dense<0.000000e+00> : vector<16x16xf32>
    %171 = tpu.matmul %166, %168, %cst_62 {dimension_numbers = #tpu.dot_dimension_numbers<[1], [1], [0], [0], [0, 0, 1, 0], [], []>} : vector<16x8xbf16>, vector<16x8xbf16>, vector<16x16xf32> -> vector<16x16xf32>
    %cst_63 = arith.constant dense<0xFF800000> : vector<16xf32>
    %172 = vector.multi_reduction <maximumf>, %171, %cst_63 [1] : vector<16x16xf32> to vector<16xf32>
    %173 = vector.shape_cast %172 : vector<16xf32> to vector<16x1xf32>
    %174 = vector.broadcast %173 : vector<16x1xf32> to vector<16x16xf32>
    %175 = arith.subf %171, %174 : vector<16x16xf32>
    %176 = math.exp %175 : vector<16x16xf32>
    %cst_64 = arith.constant dense<0.000000e+00> : vector<16xf32>
    %177 = vector.multi_reduction <add>, %176, %cst_64 [1] : vector<16x16xf32> to vector<16xf32>
    %178 = vector.shape_cast %177 : vector<16xf32> to vector<16x1xf32>
    %179 = tpu.reciprocal %178 {approx = true} : vector<16x1xf32> -> vector<16x1xf32>
    %180 = vector.broadcast %179 : vector<16x1xf32> to vector<16x16xf32>
    %181 = arith.mulf %176, %180 : vector<16x16xf32>
    %182 = arith.truncf %181 : vector<16x16xf32> to vector<16x16xbf16>
    %cst_65 = arith.constant dense<0.000000e+00> : vector<16x8xf32>
    %183 = tpu.matmul %182, %170, %cst_65 {dimension_numbers = #tpu.dot_dimension_numbers<[1], [0], [0], [1], [0, 0, 1, 1], [], []>} : vector<16x16xbf16>, vector<16x8xbf16>, vector<16x8xf32> -> vector<16x8xf32>
    %184 = arith.truncf %183 : vector<16x8xf32> to vector<16x8xbf16>
    %cst_66 = arith.constant dense<0.000000e+00> : vector<16x32xf32>
    %185 = tpu.matmul %184, %26, %cst_66 {dimension_numbers = #tpu.dot_dimension_numbers<[1], [0], [0], [1], [0, 0, 1, 1], [], []>} : vector<16x8xbf16>, vector<8x32xbf16>, vector<16x32xf32> -> vector<16x32xf32>
    %186 = arith.addf %162, %185 : vector<16x32xf32>
    %187 = vector.extract_strided_slice %135 {offsets = [0, 16], sizes = [16, 8], strides = [1, 1]} : vector<16x32xf32> to vector<16x8xf32>
    %cst_67 = arith.constant 0.353553385 : f32
    %188 = vector.broadcast %cst_67 : f32 to vector<16x8xf32>
    %189 = arith.mulf %187, %188 : vector<16x8xf32>
    %190 = arith.truncf %189 : vector<16x8xf32> to vector<16x8xbf16>
    %191 = vector.extract_strided_slice %136 {offsets = [0, 16], sizes = [16, 8], strides = [1, 1]} : vector<16x32xf32> to vector<16x8xf32>
    %192 = arith.truncf %191 : vector<16x8xf32> to vector<16x8xbf16>
    %193 = vector.extract_strided_slice %137 {offsets = [0, 16], sizes = [16, 8], strides = [1, 1]} : vector<16x32xf32> to vector<16x8xf32>
    %194 = arith.truncf %193 : vector<16x8xf32> to vector<16x8xbf16>
    %cst_68 = arith.constant dense<0.000000e+00> : vector<16x16xf32>
    %195 = tpu.matmul %190, %192, %cst_68 {dimension_numbers = #tpu.dot_dimension_numbers<[1], [1], [0], [0], [0, 0, 1, 0], [], []>} : vector<16x8xbf16>, vector<16x8xbf16>, vector<16x16xf32> -> vector<16x16xf32>
    %cst_69 = arith.constant dense<0xFF800000> : vector<16xf32>
    %196 = vector.multi_reduction <maximumf>, %195, %cst_69 [1] : vector<16x16xf32> to vector<16xf32>
    %197 = vector.shape_cast %196 : vector<16xf32> to vector<16x1xf32>
    %198 = vector.broadcast %197 : vector<16x1xf32> to vector<16x16xf32>
    %199 = arith.subf %195, %198 : vector<16x16xf32>
    %200 = math.exp %199 : vector<16x16xf32>
    %cst_70 = arith.constant dense<0.000000e+00> : vector<16xf32>
    %201 = vector.multi_reduction <add>, %200, %cst_70 [1] : vector<16x16xf32> to vector<16xf32>
    %202 = vector.shape_cast %201 : vector<16xf32> to vector<16x1xf32>
    %203 = tpu.reciprocal %202 {approx = true} : vector<16x1xf32> -> vector<16x1xf32>
    %204 = vector.broadcast %203 : vector<16x1xf32> to vector<16x16xf32>
    %205 = arith.mulf %200, %204 : vector<16x16xf32>
    %206 = arith.truncf %205 : vector<16x16xf32> to vector<16x16xbf16>
    %cst_71 = arith.constant dense<0.000000e+00> : vector<16x8xf32>
    %207 = tpu.matmul %206, %194, %cst_71 {dimension_numbers = #tpu.dot_dimension_numbers<[1], [0], [0], [1], [0, 0, 1, 1], [], []>} : vector<16x16xbf16>, vector<16x8xbf16>, vector<16x8xf32> -> vector<16x8xf32>
    %208 = arith.truncf %207 : vector<16x8xf32> to vector<16x8xbf16>
    %cst_72 = arith.constant dense<0.000000e+00> : vector<16x32xf32>
    %209 = tpu.matmul %208, %27, %cst_72 {dimension_numbers = #tpu.dot_dimension_numbers<[1], [0], [0], [1], [0, 0, 1, 1], [], []>} : vector<16x8xbf16>, vector<8x32xbf16>, vector<16x32xf32> -> vector<16x32xf32>
    %210 = arith.addf %186, %209 : vector<16x32xf32>
    %211 = vector.extract_strided_slice %135 {offsets = [0, 24], sizes = [16, 8], strides = [1, 1]} : vector<16x32xf32> to vector<16x8xf32>
    %cst_73 = arith.constant 0.353553385 : f32
    %212 = vector.broadcast %cst_73 : f32 to vector<16x8xf32>
    %213 = arith.mulf %211, %212 : vector<16x8xf32>
    %214 = arith.truncf %213 : vector<16x8xf32> to vector<16x8xbf16>
    %215 = vector.extract_strided_slice %136 {offsets = [0, 24], sizes = [16, 8], strides = [1, 1]} : vector<16x32xf32> to vector<16x8xf32>
    %216 = arith.truncf %215 : vector<16x8xf32> to vector<16x8xbf16>
    %217 = vector.extract_strided_slice %137 {offsets = [0, 24], sizes = [16, 8], strides = [1, 1]} : vector<16x32xf32> to vector<16x8xf32>
    %218 = arith.truncf %217 : vector<16x8xf32> to vector<16x8xbf16>
    %cst_74 = arith.constant dense<0.000000e+00> : vector<16x16xf32>
    %219 = tpu.matmul %214, %216, %cst_74 {dimension_numbers = #tpu.dot_dimension_numbers<[1], [1], [0], [0], [0, 0, 1, 0], [], []>} : vector<16x8xbf16>, vector<16x8xbf16>, vector<16x16xf32> -> vector<16x16xf32>
    %cst_75 = arith.constant dense<0xFF800000> : vector<16xf32>
    %220 = vector.multi_reduction <maximumf>, %219, %cst_75 [1] : vector<16x16xf32> to vector<16xf32>
    %221 = vector.shape_cast %220 : vector<16xf32> to vector<16x1xf32>
    %222 = vector.broadcast %221 : vector<16x1xf32> to vector<16x16xf32>
    %223 = arith.subf %219, %222 : vector<16x16xf32>
    %224 = math.exp %223 : vector<16x16xf32>
    %cst_76 = arith.constant dense<0.000000e+00> : vector<16xf32>
    %225 = vector.multi_reduction <add>, %224, %cst_76 [1] : vector<16x16xf32> to vector<16xf32>
    %226 = vector.shape_cast %225 : vector<16xf32> to vector<16x1xf32>
    %227 = tpu.reciprocal %226 {approx = true} : vector<16x1xf32> -> vector<16x1xf32>
    %228 = vector.broadcast %227 : vector<16x1xf32> to vector<16x16xf32>
    %229 = arith.mulf %224, %228 : vector<16x16xf32>
    %230 = arith.truncf %229 : vector<16x16xf32> to vector<16x16xbf16>
    %cst_77 = arith.constant dense<0.000000e+00> : vector<16x8xf32>
    %231 = tpu.matmul %230, %218, %cst_77 {dimension_numbers = #tpu.dot_dimension_numbers<[1], [0], [0], [1], [0, 0, 1, 1], [], []>} : vector<16x16xbf16>, vector<16x8xbf16>, vector<16x8xf32> -> vector<16x8xf32>
    %232 = arith.truncf %231 : vector<16x8xf32> to vector<16x8xbf16>
    %cst_78 = arith.constant dense<0.000000e+00> : vector<16x32xf32>
    %233 = tpu.matmul %232, %28, %cst_78 {dimension_numbers = #tpu.dot_dimension_numbers<[1], [0], [0], [1], [0, 0, 1, 1], [], []>} : vector<16x8xbf16>, vector<8x32xbf16>, vector<16x32xf32> -> vector<16x32xf32>
    %234 = arith.addf %210, %233 : vector<16x32xf32>
    %235 = vector.broadcast %29 : vector<1x32xf32> to vector<16x32xf32>
    %236 = arith.addf %234, %235 : vector<16x32xf32>
    %c1 = arith.constant 1 : index
    %c0_79 = arith.constant 0 : index
    %c0_80 = arith.constant 0 : index
    %237 = vector.load %arg12[%c1, %c0_79, %c0_80] : memref<2x16x32xf32, #tpu.memory_space<vmem>>, vector<1x16x32xf32>
    %238 = vector.shape_cast %237 : vector<1x16x32xf32> to vector<16x32xf32>
    %239 = vector.shape_cast %236 : vector<16x32xf32> to vector<1x16x32xf32>
    tpu.vector_store %arg12[%c1, %c0_79, %c0_80], %239 {strides = array<i32>} : memref<2x16x32xf32, #tpu.memory_space<vmem>>, vector<1x16x32xf32>,
    return
  }
  func.func @transform_0(%arg0: i32) -> (i32, i32, i32) {
    %c0_i32 = arith.constant 0 : i32
    %c0_i32_0 = arith.constant 0 : i32
    %c0_i32_1 = arith.constant 0 : i32
    return %arg0, %c0_i32, %c0_i32_0 : i32, i32, i32
  }
  func.func @transform_1(%arg0: i32) -> (i32, i32, i32) {
    %c0_i32 = arith.constant 0 : i32
    %c0_i32_0 = arith.constant 0 : i32
    %c0_i32_1 = arith.constant 0 : i32
    return %arg0, %c0_i32, %c0_i32_0 : i32, i32, i32
  }
  func.func @transform_2(%arg0: i32) -> (i32, i32, i32) {
    %c0_i32 = arith.constant 0 : i32
    %c0_i32_0 = arith.constant 0 : i32
    %c0_i32_1 = arith.constant 0 : i32
    return %arg0, %c0_i32, %c0_i32_0 : i32, i32, i32
  }
  func.func @transform_3(%arg0: i32) -> (i32, i32) {
    %c0_i32 = arith.constant 0 : i32
    %c0_i32_0 = arith.constant 0 : i32
    %c0_i32_1 = arith.constant 0 : i32
    return %c0_i32, %c0_i32_0 : i32, i32
  }
  func.func @transform_4(%arg0: i32) -> (i32, i32) {
    %c0_i32 = arith.constant 0 : i32
    %c0_i32_0 = arith.constant 0 : i32
    %c0_i32_1 = arith.constant 0 : i32
    return %c0_i32, %c0_i32_0 : i32, i32
  }
  func.func @transform_5(%arg0: i32) -> (i32, i32) {
    %c0_i32 = arith.constant 0 : i32
    %c0_i32_0 = arith.constant 0 : i32
    %c0_i32_1 = arith.constant 0 : i32
    return %c0_i32, %c0_i32_0 : i32, i32
  }
  func.func @transform_6(%arg0: i32) -> (i32, i32) {
    %c0_i32 = arith.constant 0 : i32
    %c0_i32_0 = arith.constant 0 : i32
    %c0_i32_1 = arith.constant 0 : i32
    return %c0_i32, %c0_i32_0 : i32, i32
  }
  func.func @transform_7(%arg0: i32) -> (i32, i32) {
    %c0_i32 = arith.constant 0 : i32
    %c0_i32_0 = arith.constant 0 : i32
    %c0_i32_1 = arith.constant 0 : i32
    return %c0_i32, %c0_i32_0 : i32, i32
  }
  func.func @transform_8(%arg0: i32) -> (i32, i32) {
    %c0_i32 = arith.constant 0 : i32
    %c0_i32_0 = arith.constant 0 : i32
    %c0_i32_1 = arith.constant 0 : i32
    return %c0_i32, %c0_i32_0 : i32, i32
  }
  func.func @transform_9(%arg0: i32) -> (i32, i32) {
    %c0_i32 = arith.constant 0 : i32
    %c0_i32_0 = arith.constant 0 : i32
    %c0_i32_1 = arith.constant 0 : i32
    return %c0_i32, %c0_i32_0 : i32, i32
  }
  func.func @transform_10(%arg0: i32) -> (i32, i32) {
    %c0_i32 = arith.constant 0 : i32
    %c0_i32_0 = arith.constant 0 : i32
    %c0_i32_1 = arith.constant 0 : i32
    return %c0_i32, %c0_i32_0 : i32, i32
  }
  func.func @transform_11(%arg0: i32) -> (i32, i32, i32) {
    %c0_i32 = arith.constant 0 : i32
    %c0_i32_0 = arith.constant 0 : i32
    %c0_i32_1 = arith.constant 0 : i32
    return %arg0, %c0_i32, %c0_i32_0 : i32, i32, i32
  }
}

</mosaic_0001>

<llo_original>
// kernel: tpu_custom_call.1
$region0: #{tpu_custom_call.1}
  #allocation0 [shape = 'u32[]', space=smem, size = 0x4, offset = 0x4, fixed_abs, tag = 'smem constant byte address 0x4 - core index']
  #allocation1 [shape = 'u32[144,128]{1,0:T(1,128)}', space=vmem, size = 0x12000, scoped, tag = 'internal scratch']
  %s0 = inlined_call_operand.hbm [shape: f32[2,16,32], index: 0, kind: input, shape index: {}]
  %s1 = inlined_call_operand.hbm [shape: f32[2,16,32], index: 1, kind: input, shape index: {}]
  %s2 = inlined_call_operand.hbm [shape: f32[2,16,32], index: 2, kind: input, shape index: {}]
  %s3 = inlined_call_operand.hbm [shape: bf16[32,32], index: 3, kind: input, shape index: {}]
  %s4 = inlined_call_operand.hbm [shape: f32[1,32], index: 4, kind: input, shape index: {}]
  %s5 = inlined_call_operand.hbm [shape: bf16[32,32], index: 5, kind: input, shape index: {}]
  %s6 = inlined_call_operand.hbm [shape: f32[1,32], index: 6, kind: input, shape index: {}]
  %s7 = inlined_call_operand.hbm [shape: bf16[32,32], index: 7, kind: input, shape index: {}]
  %s8 = inlined_call_operand.hbm [shape: f32[1,32], index: 8, kind: input, shape index: {}]
  %s9 = inlined_call_operand.vmem [shape: bf16[32,32], index: 9, kind: input, shape index: {}]
  %s10 = inlined_call_operand.vmem [shape: f32[1,32], index: 10, kind: input, shape index: {}]
  %s11 = inlined_call_operand.hbm [shape: f32[2,16,32], index: 11, kind: output, shape index: {}]
  %s12 = sld [smem:[#allocation0]]
  $region90: #{tpu_custom_call.1} parent=0
    _
  %s14 = ssub.s32 1, %s12
  %s15 = scalar_select 0, %s14, %s12
  $region1: #{tpu_custom_call.1} parent=0
    #allocation2 [shape = 'u8[16384]{0}', space=vmem, size = 0x4000, scoped, tag = 'input window, operand 0, single buffered']
    #allocation3 [shape = 's32[1]{0}', space=sflag, size = 0x4, scoped, tag = 'scoped memory for tpu_custom_call.1']
    #allocation4 [shape = 's32[1]{0}', space=sflag, size = 0x4, scoped, tag = 'scoped memory for tpu_custom_call.1']
    #allocation5 [shape = 'u8[16384]{0}', space=vmem, size = 0x4000, scoped, tag = 'input window, operand 1, single buffered']
    #allocation6 [shape = 's32[1]{0}', space=sflag, size = 0x4, scoped, tag = 'scoped memory for tpu_custom_call.1']
    #allocation7 [shape = 'u8[16384]{0}', space=vmem, size = 0x4000, scoped, tag = 'input window, operand 2, single buffered']
    #allocation8 [shape = 'u8[8192]{0}', space=vmem, size = 0x2000, scoped, tag = 'input window, operand 3, single buffered']
    #allocation9 [shape = 's32[1]{0}', space=sflag, size = 0x4, scoped, tag = 'scoped memory for tpu_custom_call.1']
    #allocation10 [shape = 'u8[512]{0}', space=vmem, size = 0x400, scoped, tag = 'input window, operand 4, single buffered']
    #allocation11 [shape = 'u8[8192]{0}', space=vmem, size = 0x2000, scoped, tag = 'input window, operand 5, single buffered']
    #allocation12 [shape = 's32[1]{0}', space=sflag, size = 0x4, scoped, tag = 'scoped memory for tpu_custom_call.1']
    #allocation13 [shape = 'u8[512]{0}', space=vmem, size = 0x400, scoped, tag = 'input window, operand 6, single buffered']
    #allocation14 [shape = 'u8[8192]{0}', space=vmem, size = 0x2000, scoped, tag = 'input window, operand 7, single buffered']
    #allocation15 [shape = 's32[1]{0}', space=sflag, size = 0x4, scoped, tag = 'scoped memory for tpu_custom_call.1']
    #allocation16 [shape = 'u8[512]{0}', space=vmem, size = 0x400, scoped, tag = 'input window, operand 8, single buffered']
    #allocation17 [shape = 'u8[16384]{0}', space=vmem, size = 0x4000, scoped, tag = 'output window, operand 0, single buffered']
    %16 = vsyncpa [#allocation3], 0
    %17 = vsyncpa [#allocation6], 0
    %18 = vsyncpa [#allocation9], 0
    %19 = vsyncpa [#allocation12], 0
    %20 = vsyncpa [#allocation15], 0
    %21 = vsyncpa [#allocation4], 0
    // Predicated region
    $region2: #{tpu_custom_call.1} parent=1 // pred_check
      _
    $region3: #{tpu_custom_call.1} parent=1 // pred_check_branch
      %23 = sbr.rel (0) target = $region5
    $region4: #{tpu_custom_call.1} parent=1 // pred_region
      %s25 = ssub.s32 512, 512
      %26 = vsyncadd [#allocation3], %s25
      %s27 = sshll.u32 [#allocation2], 4
      %s28 = int_to_ptr.vmem [resolvable:$true] %s27
      %33 = dma.hbm_to_vmem [thread:$0]  %s0, 512, %s28, [#allocation3], 128, 128, 8
    $region5: #{tpu_custom_call.1} parent=1 // pred_fallthru
      _
    // Predicated region
    $region6: #{tpu_custom_call.1} parent=1 // pred_check
      _
    $region7: #{tpu_custom_call.1} parent=1 // pred_check_branch
      %35 = sbr.rel (0) target = $region9
    $region8: #{tpu_custom_call.1} parent=1 // pred_region
      %s37 = ssub.s32 512, 512
      %38 = vsyncadd [#allocation6], %s37
      %s39 = sshll.u32 [#allocation5], 4
      %s40 = int_to_ptr.vmem [resolvable:$true] %s39
      %45 = dma.hbm_to_vmem [thread:$0]  %s1, 512, %s40, [#allocation6], 128, 128, 8
    $region9: #{tpu_custom_call.1} parent=1 // pred_fallthru
      _
    // Predicated region
    $region10: #{tpu_custom_call.1} parent=1 // pred_check
      _
    $region11: #{tpu_custom_call.1} parent=1 // pred_check_branch
      %47 = sbr.rel (0) target = $region13
    $region12: #{tpu_custom_call.1} parent=1 // pred_region
      %s49 = ssub.s32 512, 512
      %50 = vsyncadd [#allocation6], %s49
      %s51 = sshll.u32 [#allocation7], 4
      %s52 = int_to_ptr.vmem [resolvable:$true] %s51
      %57 = dma.hbm_to_vmem [thread:$0]  %s2, 512, %s52, [#allocation6], 128, 128, 8
    $region13: #{tpu_custom_call.1} parent=1 // pred_fallthru
      _
    // Predicated region
    $region14: #{tpu_custom_call.1} parent=1 // pred_check
      _
    $region15: #{tpu_custom_call.1} parent=1 // pred_check_branch
      %59 = sbr.rel (0) target = $region17
    $region16: #{tpu_custom_call.1} parent=1 // pred_region
      %s61 = ssub.s32 256, 256
      %62 = vsyncadd [#allocation9], %s61
      %s63 = sshll.u32 [#allocation8], 4
      %s64 = int_to_ptr.vmem [resolvable:$true] %s63
      %69 = dma.hbm_to_vmem [thread:$0]  %s3, 256, %s64, [#allocation9], 64, 64, 4
    $region17: #{tpu_custom_call.1} parent=1 // pred_fallthru
      _
    // Predicated region
    $region18: #{tpu_custom_call.1} parent=1 // pred_check
      _
    $region19: #{tpu_custom_call.1} parent=1 // pred_check_branch
      %71 = sbr.rel (0) target = $region21
    $region20: #{tpu_custom_call.1} parent=1 // pred_region
      %s73 = ssub.s32 16, 16
      %74 = vsyncadd [#allocation9], %s73
      %s76 = sshll.u32 [#allocation10], 4
      %s77 = int_to_ptr.vmem [resolvable:$true] %s76
      %79 = dma.hbm_to_vmem [thread:$0]  %s4, 16, %s77, [#allocation9]
    $region21: #{tpu_custom_call.1} parent=1 // pred_fallthru
      _
    // Predicated region
    $region22: #{tpu_custom_call.1} parent=1 // pred_check
      _
    $region23: #{tpu_custom_call.1} parent=1 // pred_check_branch
      %81 = sbr.rel (0) target = $region25
    $region24: #{tpu_custom_call.1} parent=1 // pred_region
      %s83 = ssub.s32 256, 256
      %84 = vsyncadd [#allocation12], %s83
      %s85 = sshll.u32 [#allocation11], 4
      %s86 = int_to_ptr.vmem [resolvable:$true] %s85
      %91 = dma.hbm_to_vmem [thread:$0]  %s5, 256, %s86, [#allocation12], 64, 64, 4
    $region25: #{tpu_custom_call.1} parent=1 // pred_fallthru
      _
    // Predicated region
    $region26: #{tpu_custom_call.1} parent=1 // pred_check
      _
    $region27: #{tpu_custom_call.1} parent=1 // pred_check_branch
      %93 = sbr.rel (0) target = $region29
    $region28: #{tpu_custom_call.1} parent=1 // pred_region
      %s95 = ssub.s32 16, 16
      %96 = vsyncadd [#allocation12], %s95
      %s98 = sshll.u32 [#allocation13], 4
      %s99 = int_to_ptr.vmem [resolvable:$true] %s98
      %101 = dma.hbm_to_vmem [thread:$0]  %s6, 16, %s99, [#allocation12]
    $region29: #{tpu_custom_call.1} parent=1 // pred_fallthru
      _
    // Predicated region
    $region30: #{tpu_custom_call.1} parent=1 // pred_check
      _
    $region31: #{tpu_custom_call.1} parent=1 // pred_check_branch
      %103 = sbr.rel (0) target = $region33
    $region32: #{tpu_custom_call.1} parent=1 // pred_region
      %s105 = ssub.s32 256, 256
      %106 = vsyncadd [#allocation15], %s105
      %s107 = sshll.u32 [#allocation14], 4
      %s108 = int_to_ptr.vmem [resolvable:$true] %s107
      %113 = dma.hbm_to_vmem [thread:$0]  %s7, 256, %s108, [#allocation15], 64, 64, 4
    $region33: #{tpu_custom_call.1} parent=1 // pred_fallthru
      _
    // Predicated region
    $region34: #{tpu_custom_call.1} parent=1 // pred_check
      _
    $region35: #{tpu_custom_call.1} parent=1 // pred_check_branch
      %115 = sbr.rel (0) target = $region37
    $region36: #{tpu_custom_call.1} parent=1 // pred_region
      %s117 = ssub.s32 16, 16
      %118 = vsyncadd [#allocation15], %s117
      %s120 = sshll.u32 [#allocation16], 4
      %s121 = int_to_ptr.vmem [resolvable:$true] %s120
      %123 = dma.hbm_to_vmem [thread:$0]  %s8, 16, %s121, [#allocation15]
    $region37: #{tpu_custom_call.1} parent=1 // pred_fallthru
      _
    // Predicated region
    $region38: #{tpu_custom_call.1} parent=1 // pred_check
      _
    $region39: #{tpu_custom_call.1} parent=1 // pred_check_branch
      %125 = sbr.rel (0) target = $region41
    $region40: #{tpu_custom_call.1} parent=1 // pred_region
      _
    $region41: #{tpu_custom_call.1} parent=1 // pred_fallthru
      _
    // Predicated region
    $region42: #{tpu_custom_call.1} parent=1 // pred_check
      _
    $region43: #{tpu_custom_call.1} parent=1 // pred_check_branch
      %127 = sbr.rel (0) target = $region45
    $region44: #{tpu_custom_call.1} parent=1 // pred_region
      _
    $region45: #{tpu_custom_call.1} parent=1 // pred_fallthru
      _
    // Predicated region
    $region46: #{tpu_custom_call.1} parent=1 // pred_check
      _
    $region47: #{tpu_custom_call.1} parent=1 // pred_check_branch
      %129 = sbr.rel (0) target = $region49
    $region48: #{tpu_custom_call.1} parent=1 // pred_region
      %130 = dma.done [#allocation3], 512
    $region49: #{tpu_custom_call.1} parent=1 // pred_fallthru
      _
    // Predicated region
    $region50: #{tpu_custom_call.1} parent=1 // pred_check
      _
    $region51: #{tpu_custom_call.1} parent=1 // pred_check_branch
      %132 = sbr.rel (0) target = $region53
    $region52: #{tpu_custom_call.1} parent=1 // pred_region
      %133 = dma.done [#allocation6], 512
    $region53: #{tpu_custom_call.1} parent=1 // pred_fallthru
      _
    // Predicated region
    $region54: #{tpu_custom_call.1} parent=1 // pred_check
      _
    $region55: #{tpu_custom_call.1} parent=1 // pred_check_branch
      %135 = sbr.rel (0) target = $region57
    $region56: #{tpu_custom_call.1} parent=1 // pred_region
      %136 = dma.done [#allocation6], 512
    $region57: #{tpu_custom_call.1} parent=1 // pred_fallthru
      _
    // Predicated region
    $region58: #{tpu_custom_call.1} parent=1 // pred_check
      _
    $region59: #{tpu_custom_call.1} parent=1 // pred_check_branch
      %138 = sbr.rel (0) target = $region61
    $region60: #{tpu_custom_call.1} parent=1 // pred_region
      %139 = dma.done [#allocation9], 256
    $region61: #{tpu_custom_call.1} parent=1 // pred_fallthru
      _
    // Predicated region
    $region62: #{tpu_custom_call.1} parent=1 // pred_check
      _
    $region63: #{tpu_custom_call.1} parent=1 // pred_check_branch
      %141 = sbr.rel (0) target = $region65
    $region64: #{tpu_custom_call.1} parent=1 // pred_region
      %142 = dma.done [#allocation9], 16
    $region65: #{tpu_custom_call.1} parent=1 // pred_fallthru
      _
    // Predicated region
    $region66: #{tpu_custom_call.1} parent=1 // pred_check
      _
    $region67: #{tpu_custom_call.1} parent=1 // pred_check_branch
      %144 = sbr.rel (0) target = $region69
    $region68: #{tpu_custom_call.1} parent=1 // pred_region
      %145 = dma.done [#allocation12], 256
    $region69: #{tpu_custom_call.1} parent=1 // pred_fallthru
      _
    // Predicated region
    $region70: #{tpu_custom_call.1} parent=1 // pred_check
      _
    $region71: #{tpu_custom_call.1} parent=1 // pred_check_branch
      %147 = sbr.rel (0) target = $region73
    $region72: #{tpu_custom_call.1} parent=1 // pred_region
      %148 = dma.done [#allocation12], 16
    $region73: #{tpu_custom_call.1} parent=1 // pred_fallthru
      _
    // Predicated region
    $region74: #{tpu_custom_call.1} parent=1 // pred_check
      _
    $region75: #{tpu_custom_call.1} parent=1 // pred_check_branch
      %150 = sbr.rel (0) target = $region77
    $region76: #{tpu_custom_call.1} parent=1 // pred_region
      %151 = dma.done [#allocation15], 256
    $region77: #{tpu_custom_call.1} parent=1 // pred_fallthru
      _
    // Predicated region
    $region78: #{tpu_custom_call.1} parent=1 // pred_check
      _
    $region79: #{tpu_custom_call.1} parent=1 // pred_check_branch
      %153 = sbr.rel (0) target = $region81
    $region80: #{tpu_custom_call.1} parent=1 // pred_region
      %154 = dma.done [#allocation15], 16
    $region81: #{tpu_custom_call.1} parent=1 // pred_fallthru
      _
    %v156 = vld [vmem:[#allocation2] sm:$0xff]
    %v157 = vld [vmem:[#allocation2 + $0x8] sm:$0xff]
    %v158 = vld [vmem:[#allocation2 + $0x10] sm:$0xff]
    %v159 = vld [vmem:[#allocation2 + $0x18] sm:$0xff]
    %v160 = vpack.c.bf16 %v157, %v156
    %v161 = vpack.c.bf16 %v159, %v158
    %v162 = vld [vmem:[#allocation5] sm:$0xff]
    %v163 = vld [vmem:[#allocation5 + $0x8] sm:$0xff]
    %v164 = vld [vmem:[#allocation5 + $0x10] sm:$0xff]
    %v165 = vld [vmem:[#allocation5 + $0x18] sm:$0xff]
    %v166 = vpack.c.bf16 %v163, %v162
    %v167 = vpack.c.bf16 %v165, %v164
    %v168 = vld [vmem:[#allocation7] sm:$0xff]
    %v169 = vld [vmem:[#allocation7 + $0x8] sm:$0xff]
    %v170 = vld [vmem:[#allocation7 + $0x10] sm:$0xff]
    %v171 = vld [vmem:[#allocation7 + $0x18] sm:$0xff]
    %v172 = vpack.c.bf16 %v169, %v168
    %v173 = vpack.c.bf16 %v171, %v170
    %v174 = vld [vmem:[#allocation8] sm:$0xf]
    %v175 = vld [vmem:[#allocation8 + $0x4] sm:$0xf]
    %v176 = vld [vmem:[#allocation8 + $0x8] sm:$0xf]
    %v177 = vld [vmem:[#allocation8 + $0xc] sm:$0xf]
    %v178 = vld [vmem:[#allocation10] sm:$0x1]
    %v180 = vlaneseq
    %v181 = vshrl.u32 %v180, 7
    %v182 = vsub.s32 0, %v181
    %v183 = vrot.slane %v178, %v182
    %v189 = vunpack.c.l.b16 %v174
    %v190 = vunpack.c.l.b16 %v175
    %v191 = vunpack.c.l.b16 %v176
    %v192 = vunpack.c.l.b16 %v177
    %v193 = vpack.c.b16 %v190, %v189
    %v194 = vpack.c.b16 %v192, %v191
    %vm197 = vcmask 261120
    %v199 = vsel %vm197, %v160, 0
    %v202 = vsel %vm197, %v161, 0
    %204 = vmatprep.subr.bf16.mxu0 0
    %205 = vmatpush1.bf16.msra.mxu0 0
    %206 = vmatprep.subr.bf16.mxu0 0
    %207 = vmatpush1.bf16.msra.mxu0 0
    %208 = vmatprep.subr.bf16.mxu0 0
    %209 = vmatpush1.bf16.msra.mxu0 0
    %210 = vmatprep.subr.bf16.mxu0 0
    %211 = vmatpush1.bf16.msra.mxu0 0
    %212 = vmatprep.subr.bf16.mxu0 0
    %213 = vmatpush1.bf16.msra.mxu0 0
    %214 = vmatprep.subr.bf16.mxu0 0
    %215 = vmatpush1.bf16.msra.mxu0 0
    %216 = vmatprep.subr.bf16.mxu0 0
    %217 = vmatpush1.bf16.msra.mxu0 %v194
    %218 = vmatprep.subr.bf16.mxu0 0
    %219 = vmatpush1.bf16.msra.mxu0 %v193
    %220 = vmatprep.subr.bf16.mxu0 0
    %221 = vmatpush2.bf16.msra.mxu0 0
    %222 = vmatprep.subr.bf16.mxu0 0
    %223 = vmatpush2.bf16.msra.mxu0 0
    %224 = vmatprep.subr.bf16.mxu0 0
    %225 = vmatpush2.bf16.msra.mxu0 0
    %226 = vmatprep.subr.bf16.mxu0 0
    %227 = vmatpush2.bf16.msra.mxu0 0
    %228 = vmatprep.subr.bf16.mxu0 0
    %229 = vmatpush2.bf16.msra.mxu0 0
    %230 = vmatprep.subr.bf16.mxu0 0
    %231 = vmatpush2.bf16.msra.mxu0 0
    %232 = vmatprep.subr.bf16.mxu0 0
    %233 = vmatpush2.bf16.msra.mxu0 0
    %234 = vmatprep.subr.bf16.mxu0 0
    %235 = vmatpush2.bf16.msra.mxu0 0
    %236 = vmatprep.mubr.bf16.mxu0 0
    %237 = vmatmul.mubr.bf16.gmra.mxu0 %v199
    %v238 = vpop.f32.mrf.mxu0
    %v239 = vadd.f32 %v183, %v238
    %v240 = vpop.f32.mrf.mxu0
    %v241 = vpop.f32.mrf.mxu0
    %v242 = vadd.f32 %v183, %v241
    %v243 = vpop.f32.mrf.mxu0
    %244 = vmatprep.mubr.bf16.mxu0 0
    %245 = vmatmul.mubr.bf16.gmra.mxu0 %v202
    %v246 = vpop.f32.mrf.mxu0
    %v247 = vadd.f32 %v183, %v246
    %v248 = vpop.f32.mrf.mxu0
    %v249 = vpop.f32.mrf.mxu0
    %v250 = vadd.f32 %v183, %v249
    %v251 = vpop.f32.mrf.mxu0
    %252 = vdwg.mxu0
    %v253 = vld [vmem:[#allocation11] sm:$0xf]
    %v254 = vld [vmem:[#allocation11 + $0x4] sm:$0xf]
    %v255 = vld [vmem:[#allocation11 + $0x8] sm:$0xf]
    %v256 = vld [vmem:[#allocation11 + $0xc] sm:$0xf]
    %v257 = vld [vmem:[#allocation13] sm:$0x1]
    %v259 = vlaneseq
    %v260 = vshrl.u32 %v259, 7
    %v261 = vsub.s32 0, %v260
    %v262 = vrot.slane %v257, %v261
    %v268 = vunpack.c.l.b16 %v253
    %v269 = vunpack.c.l.b16 %v254
    %v270 = vunpack.c.l.b16 %v255
    %v271 = vunpack.c.l.b16 %v256
    %v272 = vpack.c.b16 %v269, %v268
    %v273 = vpack.c.b16 %v271, %v270
    %v277 = vsel %vm197, %v166, 0
    %v280 = vsel %vm197, %v167, 0
    %282 = vmatprep.subr.bf16.mxu0 0
    %283 = vmatpush1.bf16.msra.mxu0 0
    %284 = vmatprep.subr.bf16.mxu0 0
    %285 = vmatpush1.bf16.msra.mxu0 0
    %286 = vmatprep.subr.bf16.mxu0 0
    %287 = vmatpush1.bf16.msra.mxu0 0
    %288 = vmatprep.subr.bf16.mxu0 0
    %289 = vmatpush1.bf16.msra.mxu0 0
    %290 = vmatprep.subr.bf16.mxu0 0
    %291 = vmatpush1.bf16.msra.mxu0 0
    %292 = vmatprep.subr.bf16.mxu0 0
    %293 = vmatpush1.bf16.msra.mxu0 0
    %294 = vmatprep.subr.bf16.mxu0 0
    %295 = vmatpush1.bf16.msra.mxu0 %v273
    %296 = vmatprep.subr.bf16.mxu0 0
    %297 = vmatpush1.bf16.msra.mxu0 %v272
    %298 = vmatprep.subr.bf16.mxu0 0
    %299 = vmatpush2.bf16.msra.mxu0 0
    %300 = vmatprep.subr.bf16.mxu0 0
    %301 = vmatpush2.bf16.msra.mxu0 0
    %302 = vmatprep.subr.bf16.mxu0 0
    %303 = vmatpush2.bf16.msra.mxu0 0
    %304 = vmatprep.subr.bf16.mxu0 0
    %305 = vmatpush2.bf16.msra.mxu0 0
    %306 = vmatprep.subr.bf16.mxu0 0
    %307 = vmatpush2.bf16.msra.mxu0 0
    %308 = vmatprep.subr.bf16.mxu0 0
    %309 = vmatpush2.bf16.msra.mxu0 0
    %310 = vmatprep.subr.bf16.mxu0 0
    %311 = vmatpush2.bf16.msra.mxu0 0
    %312 = vmatprep.subr.bf16.mxu0 0
    %313 = vmatpush2.bf16.msra.mxu0 0
    %314 = vmatprep.mubr.bf16.mxu0 0
    %315 = vmatmul.mubr.bf16.gmra.mxu0 %v277
    %v316 = vpop.f32.mrf.mxu0
    %v317 = vadd.f32 %v262, %v316
    %v318 = vpop.f32.mrf.mxu0
    %v319 = vpop.f32.mrf.mxu0
    %v320 = vadd.f32 %v262, %v319
    %v321 = vpop.f32.mrf.mxu0
    %322 = vmatprep.mubr.bf16.mxu0 0
    %323 = vmatmul.mubr.bf16.gmra.mxu0 %v280
    %v324 = vpop.f32.mrf.mxu0
    %v325 = vadd.f32 %v262, %v324
    %v326 = vpop.f32.mrf.mxu0
    %v327 = vpop.f32.mrf.mxu0
    %v328 = vadd.f32 %v262, %v327
    %v329 = vpop.f32.mrf.mxu0
    %330 = vdwg.mxu0
    %v331 = vld [vmem:[#allocation14] sm:$0xf]
    %v332 = vld [vmem:[#allocation14 + $0x4] sm:$0xf]
    %v333 = vld [vmem:[#allocation14 + $0x8] sm:$0xf]
    %v334 = vld [vmem:[#allocation14 + $0xc] sm:$0xf]
    %v335 = vld [vmem:[#allocation16] sm:$0x1]
    %v337 = vlaneseq
    %v338 = vshrl.u32 %v337, 7
    %v339 = vsub.s32 0, %v338
    %v340 = vrot.slane %v335, %v339
    %v346 = vunpack.c.l.b16 %v331
    %v347 = vunpack.c.l.b16 %v332
    %v348 = vunpack.c.l.b16 %v333
    %v349 = vunpack.c.l.b16 %v334
    %v350 = vpack.c.b16 %v347, %v346
    %v351 = vpack.c.b16 %v349, %v348
    %v355 = vsel %vm197, %v172, 0
    %v358 = vsel %vm197, %v173, 0
    %360 = vmatprep.subr.bf16.mxu0 0
    %361 = vmatpush1.bf16.msra.mxu0 0
    %362 = vmatprep.subr.bf16.mxu0 0
    %363 = vmatpush1.bf16.msra.mxu0 0
    %364 = vmatprep.subr.bf16.mxu0 0
    %365 = vmatpush1.bf16.msra.mxu0 0
    %366 = vmatprep.subr.bf16.mxu0 0
    %367 = vmatpush1.bf16.msra.mxu0 0
    %368 = vmatprep.subr.bf16.mxu0 0
    %369 = vmatpush1.bf16.msra.mxu0 0
    %370 = vmatprep.subr.bf16.mxu0 0
    %371 = vmatpush1.bf16.msra.mxu0 0
    %372 = vmatprep.subr.bf16.mxu0 0
    %373 = vmatpush1.bf16.msra.mxu0 %v351
    %374 = vmatprep.subr.bf16.mxu0 0
    %375 = vmatpush1.bf16.msra.mxu0 %v350
    %376 = vmatprep.subr.bf16.mxu0 0
    %377 = vmatpush2.bf16.msra.mxu0 0
    %378 = vmatprep.subr.bf16.mxu0 0
    %379 = vmatpush2.bf16.msra.mxu0 0
    %380 = vmatprep.subr.bf16.mxu0 0
    %381 = vmatpush2.bf16.msra.mxu0 0
    %382 = vmatprep.subr.bf16.mxu0 0
    %383 = vmatpush2.bf16.msra.mxu0 0
    %384 = vmatprep.subr.bf16.mxu0 0
    %385 = vmatpush2.bf16.msra.mxu0 0
    %386 = vmatprep.subr.bf16.mxu0 0
    %387 = vmatpush2.bf16.msra.mxu0 0
    %388 = vmatprep.subr.bf16.mxu0 0
    %389 = vmatpush2.bf16.msra.mxu0 0
    %390 = vmatprep.subr.bf16.mxu0 0
    %391 = vmatpush2.bf16.msra.mxu0 0
    %392 = vmatprep.mubr.bf16.mxu0 0
    %393 = vmatmul.mubr.bf16.gmra.mxu0 %v355
    %v394 = vpop.f32.mrf.mxu0
    %v395 = vadd.f32 %v340, %v394
    %v396 = vpop.f32.mrf.mxu0
    %v397 = vpop.f32.mrf.mxu0
    %v398 = vadd.f32 %v340, %v397
    %v399 = vpop.f32.mrf.mxu0
    %400 = vmatprep.mubr.bf16.mxu0 0
    %401 = vmatmul.mubr.bf16.gmra.mxu0 %v358
    %v402 = vpop.f32.mrf.mxu0
    %v403 = vadd.f32 %v340, %v402
    %v404 = vpop.f32.mrf.mxu0
    %v405 = vpop.f32.mrf.mxu0
    %v406 = vadd.f32 %v340, %v405
    %v407 = vpop.f32.mrf.mxu0
    %408 = vdwg.mxu0
    %v409 = vld [vmem:[%s9] sm:$0xf]
    %v410 = vld [vmem:[%s9 + $0x4] sm:$0xf]
    %v411 = vld [vmem:[%s9 + $0x8] sm:$0xf]
    %v412 = vld [vmem:[%s9 + $0xc] sm:$0xf]
    %v413 = vld [vmem:[%s10] sm:$0x1]
    %v414 = vmul.f32 %v239, 0.35355338
    %v415 = vmul.f32 %v242, 0.35355338
    %v416 = vpack.c.bf16 %v415, %v414
    %v417 = vpack.c.bf16 %v320, %v317
    %v418 = vpack.c.bf16 %v398, %v395
    %vm419 = vcmask 64512
    %v421 = vsel %vm419, %v416, 0
    %v424 = vsel %vm419, %v417, 0
    %426 = vmatprep.subr.bf16.mxu0 0
    %427 = vmatpush1.bf16.xpose.msra.mxu0 0
    %428 = vmatprep.subr.bf16.mxu0 0
    %429 = vmatpush1.bf16.xpose.msra.mxu0 0
    %430 = vmatprep.subr.bf16.mxu0 0
    %431 = vmatpush1.bf16.xpose.msra.mxu0 0
    %432 = vmatprep.subr.bf16.mxu0 0
    %433 = vmatpush1.bf16.xpose.msra.mxu0 0
    %434 = vmatprep.subr.bf16.mxu0 0
    %435 = vmatpush1.bf16.xpose.msra.mxu0 0
    %436 = vmatprep.subr.bf16.mxu0 0
    %437 = vmatpush1.bf16.xpose.msra.mxu0 0
    %438 = vmatprep.subr.bf16.mxu0 0
    %439 = vmatpush1.bf16.xpose.msra.mxu0 0
    %440 = vmatprep.subr.bf16.mxu0 0
    %441 = vmatpush1.bf16.xpose.msra.mxu0 %v424
    %442 = vmatprep.subr.bf16.mxu0 0
    %443 = vmatpush2.bf16.xpose.msra.mxu0 0
    %444 = vmatprep.subr.bf16.mxu0 0
    %445 = vmatpush2.bf16.xpose.msra.mxu0 0
    %446 = vmatprep.subr.bf16.mxu0 0
    %447 = vmatpush2.bf16.xpose.msra.mxu0 0
    %448 = vmatprep.subr.bf16.mxu0 0
    %449 = vmatpush2.bf16.xpose.msra.mxu0 0
    %450 = vmatprep.subr.bf16.mxu0 0
    %451 = vmatpush2.bf16.xpose.msra.mxu0 0
    %452 = vmatprep.subr.bf16.mxu0 0
    %453 = vmatpush2.bf16.xpose.msra.mxu0 0
    %454 = vmatprep.subr.bf16.mxu0 0
    %455 = vmatpush2.bf16.xpose.msra.mxu0 0
    %456 = vmatprep.subr.bf16.mxu0 0
    %457 = vmatpush2.bf16.xpose.msra.mxu0 0
    %458 = vmatprep.mubr.bf16.mxu0 0
    %459 = vmatmul.mubr.bf16.gmra.mxu0 %v421
    %v460 = vpop.f32.mrf.mxu0
    %v461 = vadd.f32 0.0, %v460
    %v462 = vpop.f32.mrf.mxu0
    %v463 = vpop.f32.mrf.mxu0
    %v464 = vadd.f32 0.0, %v463
    %v465 = vpop.f32.mrf.mxu0
    %466 = vdwg.mxu0
    %vm467 = vcmask 130048
    %v468 = vsel %vm467, %v461, -inf
    %469 = vmax.xlane.f32.xlu0 %v468
    %v470 = vpop.xlane.xlu0 %469
    %v471 = vsel %vm467, %v464, -inf
    %472 = vmax.xlane.f32.xlu0 %v471
    %v473 = vpop.xlane.xlu0 %472
    %v474 = vsub.f32 %v461, %v470
    %v475 = vsub.f32 %v464, %v473
    %v476 = vmul.f32 %v474, 1.442695
    %v477 = vpow.pop %v476
    %v478 = vmul.f32 %v475, 1.442695
    %v479 = vpow.pop %v478
    %v480 = vsel %vm467, %v477, 0.0
    %481 = vadd.xlane.f32.xlu0 %v480
    %v482 = vpop.xlane.xlu0 %481
    %v483 = vsel %vm467, %v479, 0.0
    %484 = vadd.xlane.f32.xlu0 %v483
    %v485 = vpop.xlane.xlu0 %484
    %v486 = vrcp.pop %v482
    %v487 = vrcp.pop %v485
    %v488 = vmul.f32 %v477, %v486
    %v489 = vmul.f32 %v479, %v487
    %v490 = vpack.c.bf16 %v489, %v488
    %v492 = vsel %vm467, %v490, 0
    %494 = vmatprep.subr.bf16.mxu0 0
    %495 = vmatpush1.bf16.msra.mxu0 0
    %496 = vmatprep.subr.bf16.mxu0 0
    %497 = vmatpush1.bf16.msra.mxu0 0
    %498 = vmatprep.subr.bf16.mxu0 0
    %499 = vmatpush1.bf16.msra.mxu0 0
    %500 = vmatprep.subr.bf16.mxu0 0
    %501 = vmatpush1.bf16.msra.mxu0 0
    %502 = vmatprep.subr.bf16.mxu0 0
    %503 = vmatpush1.bf16.msra.mxu0 0
    %504 = vmatprep.subr.bf16.mxu0 0
    %505 = vmatpush1.bf16.msra.mxu0 0
    %506 = vmatprep.subr.bf16.mxu0 0
    %507 = vmatpush1.bf16.msra.mxu0 0
    %508 = vmatprep.subr.bf16.mxu0 0
    %509 = vmatpush1.bf16.msra.mxu0 %v418
    %510 = vmatprep.subr.bf16.mxu0 0
    %511 = vmatpush2.bf16.msra.mxu0 0
    %512 = vmatprep.subr.bf16.mxu0 0
    %513 = vmatpush2.bf16.msra.mxu0 0
    %514 = vmatprep.subr.bf16.mxu0 0
    %515 = vmatpush2.bf16.msra.mxu0 0
    %516 = vmatprep.subr.bf16.mxu0 0
    %517 = vmatpush2.bf16.msra.mxu0 0
    %518 = vmatprep.subr.bf16.mxu0 0
    %519 = vmatpush2.bf16.msra.mxu0 0
    %520 = vmatprep.subr.bf16.mxu0 0
    %521 = vmatpush2.bf16.msra.mxu0 0
    %522 = vmatprep.subr.bf16.mxu0 0
    %523 = vmatpush2.bf16.msra.mxu0 0
    %524 = vmatprep.subr.bf16.mxu0 0
    %525 = vmatpush2.bf16.msra.mxu0 0
    %526 = vmatprep.mubr.bf16.mxu0 0
    %527 = vmatmul.mubr.bf16.gmra.mxu0 %v492
    %v528 = vpop.f32.mrf.mxu0
    %v529 = vadd.f32 0.0, %v528
    %v530 = vpop.f32.mrf.mxu0
    %v531 = vpop.f32.mrf.mxu0
    %v532 = vadd.f32 0.0, %v531
    %v533 = vpop.f32.mrf.mxu0
    %534 = vdwg.mxu0
    %v535 = vpack.c.bf16 %v532, %v529
    %537 = vrot.lane.b32.xlu0 %v416, 120
    %v538 = vpop.permute.xlu0 %537
    %540 = vrot.lane.b32.xlu0 %v417, 120
    %v541 = vpop.permute.xlu0 %540
    %v543 = vsel %vm419, %v538, 0
    %v546 = vsel %vm419, %v541, 0
    %548 = vmatprep.subr.bf16.mxu0 0
    %549 = vmatpush1.bf16.xpose.msra.mxu0 0
    %550 = vmatprep.subr.bf16.mxu0 0
    %551 = vmatpush1.bf16.xpose.msra.mxu0 0
    %552 = vmatprep.subr.bf16.mxu0 0
    %553 = vmatpush1.bf16.xpose.msra.mxu0 0
    %554 = vmatprep.subr.bf16.mxu0 0
    %555 = vmatpush1.bf16.xpose.msra.mxu0 0
    %556 = vmatprep.subr.bf16.mxu0 0
    %557 = vmatpush1.bf16.xpose.msra.mxu0 0
    %558 = vmatprep.subr.bf16.mxu0 0
    %559 = vmatpush1.bf16.xpose.msra.mxu0 0
    %560 = vmatprep.subr.bf16.mxu0 0
    %561 = vmatpush1.bf16.xpose.msra.mxu0 0
    %562 = vmatprep.subr.bf16.mxu0 0
    %563 = vmatpush1.bf16.xpose.msra.mxu0 %v546
    %564 = vmatprep.subr.bf16.mxu0 0
    %565 = vmatpush2.bf16.xpose.msra.mxu0 0
    %566 = vmatprep.subr.bf16.mxu0 0
    %567 = vmatpush2.bf16.xpose.msra.mxu0 0
    %568 = vmatprep.subr.bf16.mxu0 0
    %569 = vmatpush2.bf16.xpose.msra.mxu0 0
    %570 = vmatprep.subr.bf16.mxu0 0
    %571 = vmatpush2.bf16.xpose.msra.mxu0 0
    %572 = vmatprep.subr.bf16.mxu0 0
    %573 = vmatpush2.bf16.xpose.msra.mxu0 0
    %574 = vmatprep.subr.bf16.mxu0 0
    %575 = vmatpush2.bf16.xpose.msra.mxu0 0
    %576 = vmatprep.subr.bf16.mxu0 0
    %577 = vmatpush2.bf16.xpose.msra.mxu0 0
    %578 = vmatprep.subr.bf16.mxu0 0
    %579 = vmatpush2.bf16.xpose.msra.mxu0 0
    %580 = vmatprep.mubr.bf16.mxu0 0
    %581 = vmatmul.mubr.bf16.gmra.mxu0 %v543
    %v582 = vpop.f32.mrf.mxu0
    %v583 = vadd.f32 0.0, %v582
    %v584 = vpop.f32.mrf.mxu0
    %v585 = vpop.f32.mrf.mxu0
    %v586 = vadd.f32 0.0, %v585
    %v587 = vpop.f32.mrf.mxu0
    %588 = vdwg.mxu0
    %v589 = vsel %vm467, %v583, -inf
    %590 = vmax.xlane.f32.xlu0 %v589
    %v591 = vpop.xlane.xlu0 %590
    %v592 = vsel %vm467, %v586, -inf
    %593 = vmax.xlane.f32.xlu0 %v592
    %v594 = vpop.xlane.xlu0 %593
    %v595 = vsub.f32 %v583, %v591
    %v596 = vsub.f32 %v586, %v594
    %v597 = vmul.f32 %v595, 1.442695
    %v598 = vpow.pop %v597
    %v599 = vmul.f32 %v596, 1.442695
    %v600 = vpow.pop %v599
    %v601 = vsel %vm467, %v598, 0.0
    %602 = vadd.xlane.f32.xlu0 %v601
    %v603 = vpop.xlane.xlu0 %602
    %v604 = vsel %vm467, %v600, 0.0
    %605 = vadd.xlane.f32.xlu0 %v604
    %v606 = vpop.xlane.xlu0 %605
    %v607 = vrcp.pop %v603
    %v608 = vrcp.pop %v606
    %v609 = vmul.f32 %v598, %v607
    %v610 = vmul.f32 %v600, %v608
    %v611 = vpack.c.bf16 %v610, %v609
    %613 = vrot.lane.b32.xlu0 %v418, 120
    %v614 = vpop.permute.xlu0 %613
    %v617 = vsel %vm467, %v611, 0
    %619 = vmatprep.subr.bf16.mxu0 0
    %620 = vmatpush1.bf16.msra.mxu0 0
    %621 = vmatprep.subr.bf16.mxu0 0
    %622 = vmatpush1.bf16.msra.mxu0 0
    %623 = vmatprep.subr.bf16.mxu0 0
    %624 = vmatpush1.bf16.msra.mxu0 0
    %625 = vmatprep.subr.bf16.mxu0 0
    %626 = vmatpush1.bf16.msra.mxu0 0
    %627 = vmatprep.subr.bf16.mxu0 0
    %628 = vmatpush1.bf16.msra.mxu0 0
    %629 = vmatprep.subr.bf16.mxu0 0
    %630 = vmatpush1.bf16.msra.mxu0 0
    %631 = vmatprep.subr.bf16.mxu0 0
    %632 = vmatpush1.bf16.msra.mxu0 0
    %633 = vmatprep.subr.bf16.mxu0 0
    %634 = vmatpush1.bf16.msra.mxu0 %v614
    %635 = vmatprep.subr.bf16.mxu0 0
    %636 = vmatpush2.bf16.msra.mxu0 0
    %637 = vmatprep.subr.bf16.mxu0 0
    %638 = vmatpush2.bf16.msra.mxu0 0
    %639 = vmatprep.subr.bf16.mxu0 0
    %640 = vmatpush2.bf16.msra.mxu0 0
    %641 = vmatprep.subr.bf16.mxu0 0
    %642 = vmatpush2.bf16.msra.mxu0 0
    %643 = vmatprep.subr.bf16.mxu0 0
    %644 = vmatpush2.bf16.msra.mxu0 0
    %645 = vmatprep.subr.bf16.mxu0 0
    %646 = vmatpush2.bf16.msra.mxu0 0
    %647 = vmatprep.subr.bf16.mxu0 0
    %648 = vmatpush2.bf16.msra.mxu0 0
    %649 = vmatprep.subr.bf16.mxu0 0
    %650 = vmatpush2.bf16.msra.mxu0 0
    %651 = vmatprep.mubr.bf16.mxu0 0
    %652 = vmatmul.mubr.bf16.gmra.mxu0 %v617
    %v653 = vpop.f32.mrf.mxu0
    %v654 = vadd.f32 0.0, %v653
    %v655 = vpop.f32.mrf.mxu0
    %v656 = vpop.f32.mrf.mxu0
    %v657 = vadd.f32 0.0, %v656
    %v658 = vpop.f32.mrf.mxu0
    %659 = vdwg.mxu0
    %v660 = vpack.c.bf16 %v657, %v654
    %v662 = vsel %vm419, %v660, 0
    %vm664 = vcmask 1043456
    %v666 = vsel %vm664, %v410, 0
    %668 = vmatprep.subr.bf16.mxu0 0
    %669 = vmatpush1.bf16.msra.mxu0 0
    %670 = vmatprep.subr.bf16.mxu0 0
    %671 = vmatpush1.bf16.msra.mxu0 0
    %672 = vmatprep.subr.bf16.mxu0 0
    %673 = vmatpush1.bf16.msra.mxu0 0
    %674 = vmatprep.subr.bf16.mxu0 0
    %675 = vmatpush1.bf16.msra.mxu0 0
    %676 = vmatprep.subr.bf16.mxu0 0
    %677 = vmatpush1.bf16.msra.mxu0 0
    %678 = vmatprep.subr.bf16.mxu0 0
    %679 = vmatpush1.bf16.msra.mxu0 0
    %680 = vmatprep.subr.bf16.mxu0 0
    %681 = vmatpush1.bf16.msra.mxu0 0
    %682 = vmatprep.subr.bf16.mxu0 0
    %683 = vmatpush1.bf16.msra.mxu0 %v666
    %684 = vmatprep.subr.bf16.mxu0 0
    %685 = vmatpush2.bf16.msra.mxu0 0
    %686 = vmatprep.subr.bf16.mxu0 0
    %687 = vmatpush2.bf16.msra.mxu0 0
    %688 = vmatprep.subr.bf16.mxu0 0
    %689 = vmatpush2.bf16.msra.mxu0 0
    %690 = vmatprep.subr.bf16.mxu0 0
    %691 = vmatpush2.bf16.msra.mxu0 0
    %692 = vmatprep.subr.bf16.mxu0 0
    %693 = vmatpush2.bf16.msra.mxu0 0
    %694 = vmatprep.subr.bf16.mxu0 0
    %695 = vmatpush2.bf16.msra.mxu0 0
    %696 = vmatprep.subr.bf16.mxu0 0
    %697 = vmatpush2.bf16.msra.mxu0 0
    %698 = vmatprep.subr.bf16.mxu0 0
    %699 = vmatpush2.bf16.msra.mxu0 0
    %700 = vmatprep.mubr.bf16.mxu0 0
    %701 = vmatmul.mubr.bf16.gmra.mxu0 %v662
    %v702 = vpop.f32.mrf.mxu0
    %v703 = vadd.f32 0.0, %v702
    %v704 = vpop.f32.mrf.mxu0
    %v705 = vpop.f32.mrf.mxu0
    %v706 = vadd.f32 0.0, %v705
    %v707 = vpop.f32.mrf.mxu0
    %708 = vdwg.mxu0
    %v710 = vsel %vm419, %v535, 0
    %v713 = vsel %vm664, %v409, 0
    %715 = vmatprep.subr.bf16.mxu0 0
    %716 = vmatpush1.bf16.msra.mxu0 0
    %717 = vmatprep.subr.bf16.mxu0 0
    %718 = vmatpush1.bf16.msra.mxu0 0
    %719 = vmatprep.subr.bf16.mxu0 0
    %720 = vmatpush1.bf16.msra.mxu0 0
    %721 = vmatprep.subr.bf16.mxu0 0
    %722 = vmatpush1.bf16.msra.mxu0 0
    %723 = vmatprep.subr.bf16.mxu0 0
    %724 = vmatpush1.bf16.msra.mxu0 0
    %725 = vmatprep.subr.bf16.mxu0 0
    %726 = vmatpush1.bf16.msra.mxu0 0
    %727 = vmatprep.subr.bf16.mxu0 0
    %728 = vmatpush1.bf16.msra.mxu0 0
    %729 = vmatprep.subr.bf16.mxu0 0
    %730 = vmatpush1.bf16.msra.mxu0 %v713
    %731 = vmatprep.subr.bf16.mxu0 0
    %732 = vmatpush2.bf16.msra.mxu0 0
    %733 = vmatprep.subr.bf16.mxu0 0
    %734 = vmatpush2.bf16.msra.mxu0 0
    %735 = vmatprep.subr.bf16.mxu0 0
    %736 = vmatpush2.bf16.msra.mxu0 0
    %737 = vmatprep.subr.bf16.mxu0 0
    %738 = vmatpush2.bf16.msra.mxu0 0
    %739 = vmatprep.subr.bf16.mxu0 0
    %740 = vmatpush2.bf16.msra.mxu0 0
    %741 = vmatprep.subr.bf16.mxu0 0
    %742 = vmatpush2.bf16.msra.mxu0 0
    %743 = vmatprep.subr.bf16.mxu0 0
    %744 = vmatpush2.bf16.msra.mxu0 0
    %745 = vmatprep.subr.bf16.mxu0 0
    %746 = vmatpush2.bf16.msra.mxu0 0
    %747 = vmatprep.mubr.bf16.mxu0 0
    %748 = vmatmul.mubr.bf16.gmra.mxu0 %v710
    %v749 = vpop.f32.mrf.mxu0
    %v750 = vadd.f32 %v703, %v749
    %v751 = vpop.f32.mrf.mxu0
    %v752 = vpop.f32.mrf.mxu0
    %v753 = vadd.f32 %v706, %v752
    %v754 = vpop.f32.mrf.mxu0
    %755 = vdwg.mxu0
    %756 = vrot.lane.b32.xlu0 %v416, 112
    %v757 = vpop.permute.xlu0 %756
    %758 = vrot.lane.b32.xlu0 %v417, 112
    %v759 = vpop.permute.xlu0 %758
    %v761 = vsel %vm419, %v757, 0
    %v764 = vsel %vm419, %v759, 0
    %766 = vmatprep.subr.bf16.mxu0 0
    %767 = vmatpush1.bf16.xpose.msra.mxu0 0
    %768 = vmatprep.subr.bf16.mxu0 0
    %769 = vmatpush1.bf16.xpose.msra.mxu0 0
    %770 = vmatprep.subr.bf16.mxu0 0
    %771 = vmatpush1.bf16.xpose.msra.mxu0 0
    %772 = vmatprep.subr.bf16.mxu0 0
    %773 = vmatpush1.bf16.xpose.msra.mxu0 0
    %774 = vmatprep.subr.bf16.mxu0 0
    %775 = vmatpush1.bf16.xpose.msra.mxu0 0
    %776 = vmatprep.subr.bf16.mxu0 0
    %777 = vmatpush1.bf16.xpose.msra.mxu0 0
    %778 = vmatprep.subr.bf16.mxu0 0
    %779 = vmatpush1.bf16.xpose.msra.mxu0 0
    %780 = vmatprep.subr.bf16.mxu0 0
    %781 = vmatpush1.bf16.xpose.msra.mxu0 %v764
    %782 = vmatprep.subr.bf16.mxu0 0
    %783 = vmatpush2.bf16.xpose.msra.mxu0 0
    %784 = vmatprep.subr.bf16.mxu0 0
    %785 = vmatpush2.bf16.xpose.msra.mxu0 0
    %786 = vmatprep.subr.bf16.mxu0 0
    %787 = vmatpush2.bf16.xpose.msra.mxu0 0
    %788 = vmatprep.subr.bf16.mxu0 0
    %789 = vmatpush2.bf16.xpose.msra.mxu0 0
    %790 = vmatprep.subr.bf16.mxu0 0
    %791 = vmatpush2.bf16.xpose.msra.mxu0 0
    %792 = vmatprep.subr.bf16.mxu0 0
    %793 = vmatpush2.bf16.xpose.msra.mxu0 0
    %794 = vmatprep.subr.bf16.mxu0 0
    %795 = vmatpush2.bf16.xpose.msra.mxu0 0
    %796 = vmatprep.subr.bf16.mxu0 0
    %797 = vmatpush2.bf16.xpose.msra.mxu0 0
    %798 = vmatprep.mubr.bf16.mxu0 0
    %799 = vmatmul.mubr.bf16.gmra.mxu0 %v761
    %v800 = vpop.f32.mrf.mxu0
    %v801 = vadd.f32 0.0, %v800
    %v802 = vpop.f32.mrf.mxu0
    %v803 = vpop.f32.mrf.mxu0
    %v804 = vadd.f32 0.0, %v803
    %v805 = vpop.f32.mrf.mxu0
    %806 = vdwg.mxu0
    %v807 = vsel %vm467, %v801, -inf
    %808 = vmax.xlane.f32.xlu0 %v807
    %v809 = vpop.xlane.xlu0 %808
    %v810 = vsel %vm467, %v804, -inf
    %811 = vmax.xlane.f32.xlu0 %v810
    %v812 = vpop.xlane.xlu0 %811
    %v813 = vsub.f32 %v801, %v809
    %v814 = vsub.f32 %v804, %v812
    %v815 = vmul.f32 %v813, 1.442695
    %v816 = vpow.pop %v815
    %v817 = vmul.f32 %v814, 1.442695
    %v818 = vpow.pop %v817
    %v819 = vsel %vm467, %v816, 0.0
    %820 = vadd.xlane.f32.xlu0 %v819
    %v821 = vpop.xlane.xlu0 %820
    %v822 = vsel %vm467, %v818, 0.0
    %823 = vadd.xlane.f32.xlu0 %v822
    %v824 = vpop.xlane.xlu0 %823
    %v825 = vrcp.pop %v821
    %v826 = vrcp.pop %v824
    %v827 = vmul.f32 %v816, %v825
    %v828 = vmul.f32 %v818, %v826
    %v829 = vpack.c.bf16 %v828, %v827
    %830 = vrot.lane.b32.xlu0 %v418, 112
    %v831 = vpop.permute.xlu0 %830
    %v834 = vsel %vm467, %v829, 0
    %836 = vmatprep.subr.bf16.mxu0 0
    %837 = vmatpush1.bf16.msra.mxu0 0
    %838 = vmatprep.subr.bf16.mxu0 0
    %839 = vmatpush1.bf16.msra.mxu0 0
    %840 = vmatprep.subr.bf16.mxu0 0
    %841 = vmatpush1.bf16.msra.mxu0 0
    %842 = vmatprep.subr.bf16.mxu0 0
    %843 = vmatpush1.bf16.msra.mxu0 0
    %844 = vmatprep.subr.bf16.mxu0 0
    %845 = vmatpush1.bf16.msra.mxu0 0
    %846 = vmatprep.subr.bf16.mxu0 0
    %847 = vmatpush1.bf16.msra.mxu0 0
    %848 = vmatprep.subr.bf16.mxu0 0
    %849 = vmatpush1.bf16.msra.mxu0 0
    %850 = vmatprep.subr.bf16.mxu0 0
    %851 = vmatpush1.bf16.msra.mxu0 %v831
    %852 = vmatprep.subr.bf16.mxu0 0
    %853 = vmatpush2.bf16.msra.mxu0 0
    %854 = vmatprep.subr.bf16.mxu0 0
    %855 = vmatpush2.bf16.msra.mxu0 0
    %856 = vmatprep.subr.bf16.mxu0 0
    %857 = vmatpush2.bf16.msra.mxu0 0
    %858 = vmatprep.subr.bf16.mxu0 0
    %859 = vmatpush2.bf16.msra.mxu0 0
    %860 = vmatprep.subr.bf16.mxu0 0
    %861 = vmatpush2.bf16.msra.mxu0 0
    %862 = vmatprep.subr.bf16.mxu0 0
    %863 = vmatpush2.bf16.msra.mxu0 0
    %864 = vmatprep.subr.bf16.mxu0 0
    %865 = vmatpush2.bf16.msra.mxu0 0
    %866 = vmatprep.subr.bf16.mxu0 0
    %867 = vmatpush2.bf16.msra.mxu0 0
    %868 = vmatprep.mubr.bf16.mxu0 0
    %869 = vmatmul.mubr.bf16.gmra.mxu0 %v834
    %v870 = vpop.f32.mrf.mxu0
    %v871 = vadd.f32 0.0, %v870
    %v872 = vpop.f32.mrf.mxu0
    %v873 = vpop.f32.mrf.mxu0
    %v874 = vadd.f32 0.0, %v873
    %v875 = vpop.f32.mrf.mxu0
    %876 = vdwg.mxu0
    %v877 = vpack.c.bf16 %v874, %v871
    %v879 = vsel %vm419, %v877, 0
    %v882 = vsel %vm664, %v411, 0
    %884 = vmatprep.subr.bf16.mxu0 0
    %885 = vmatpush1.bf16.msra.mxu0 0
    %886 = vmatprep.subr.bf16.mxu0 0
    %887 = vmatpush1.bf16.msra.mxu0 0
    %888 = vmatprep.subr.bf16.mxu0 0
    %889 = vmatpush1.bf16.msra.mxu0 0
    %890 = vmatprep.subr.bf16.mxu0 0
    %891 = vmatpush1.bf16.msra.mxu0 0
    %892 = vmatprep.subr.bf16.mxu0 0
    %893 = vmatpush1.bf16.msra.mxu0 0
    %894 = vmatprep.subr.bf16.mxu0 0
    %895 = vmatpush1.bf16.msra.mxu0 0
    %896 = vmatprep.subr.bf16.mxu0 0
    %897 = vmatpush1.bf16.msra.mxu0 0
    %898 = vmatprep.subr.bf16.mxu0 0
    %899 = vmatpush1.bf16.msra.mxu0 %v882
    %900 = vmatprep.subr.bf16.mxu0 0
    %901 = vmatpush2.bf16.msra.mxu0 0
    %902 = vmatprep.subr.bf16.mxu0 0
    %903 = vmatpush2.bf16.msra.mxu0 0
    %904 = vmatprep.subr.bf16.mxu0 0
    %905 = vmatpush2.bf16.msra.mxu0 0
    %906 = vmatprep.subr.bf16.mxu0 0
    %907 = vmatpush2.bf16.msra.mxu0 0
    %908 = vmatprep.subr.bf16.mxu0 0
    %909 = vmatpush2.bf16.msra.mxu0 0
    %910 = vmatprep.subr.bf16.mxu0 0
    %911 = vmatpush2.bf16.msra.mxu0 0
    %912 = vmatprep.subr.bf16.mxu0 0
    %913 = vmatpush2.bf16.msra.mxu0 0
    %914 = vmatprep.subr.bf16.mxu0 0
    %915 = vmatpush2.bf16.msra.mxu0 0
    %916 = vmatprep.mubr.bf16.mxu0 0
    %917 = vmatmul.mubr.bf16.gmra.mxu0 %v879
    %v918 = vpop.f32.mrf.mxu0
    %v919 = vadd.f32 0.0, %v918
    %v920 = vpop.f32.mrf.mxu0
    %v921 = vpop.f32.mrf.mxu0
    %v922 = vadd.f32 0.0, %v921
    %v923 = vpop.f32.mrf.mxu0
    %924 = vdwg.mxu0
    %v925 = vadd.f32 %v750, %v919
    %v926 = vadd.f32 %v753, %v922
    %927 = vrot.lane.b32.xlu0 %v416, 104
    %v928 = vpop.permute.xlu0 %927
    %929 = vrot.lane.b32.xlu0 %v417, 104
    %v930 = vpop.permute.xlu0 %929
    %v932 = vsel %vm419, %v928, 0
    %v935 = vsel %vm419, %v930, 0
    %937 = vmatprep.subr.bf16.mxu0 0
    %938 = vmatpush1.bf16.xpose.msra.mxu0 0
    %939 = vmatprep.subr.bf16.mxu0 0
    %940 = vmatpush1.bf16.xpose.msra.mxu0 0
    %941 = vmatprep.subr.bf16.mxu0 0
    %942 = vmatpush1.bf16.xpose.msra.mxu0 0
    %943 = vmatprep.subr.bf16.mxu0 0
    %944 = vmatpush1.bf16.xpose.msra.mxu0 0
    %945 = vmatprep.subr.bf16.mxu0 0
    %946 = vmatpush1.bf16.xpose.msra.mxu0 0
    %947 = vmatprep.subr.bf16.mxu0 0
    %948 = vmatpush1.bf16.xpose.msra.mxu0 0
    %949 = vmatprep.subr.bf16.mxu0 0
    %950 = vmatpush1.bf16.xpose.msra.mxu0 0
    %951 = vmatprep.subr.bf16.mxu0 0
    %952 = vmatpush1.bf16.xpose.msra.mxu0 %v935
    %953 = vmatprep.subr.bf16.mxu0 0
    %954 = vmatpush2.bf16.xpose.msra.mxu0 0
    %955 = vmatprep.subr.bf16.mxu0 0
    %956 = vmatpush2.bf16.xpose.msra.mxu0 0
    %957 = vmatprep.subr.bf16.mxu0 0
    %958 = vmatpush2.bf16.xpose.msra.mxu0 0
    %959 = vmatprep.subr.bf16.mxu0 0
    %960 = vmatpush2.bf16.xpose.msra.mxu0 0
    %961 = vmatprep.subr.bf16.mxu0 0
    %962 = vmatpush2.bf16.xpose.msra.mxu0 0
    %963 = vmatprep.subr.bf16.mxu0 0
    %964 = vmatpush2.bf16.xpose.msra.mxu0 0
    %965 = vmatprep.subr.bf16.mxu0 0
    %966 = vmatpush2.bf16.xpose.msra.mxu0 0
    %967 = vmatprep.subr.bf16.mxu0 0
    %968 = vmatpush2.bf16.xpose.msra.mxu0 0
    %969 = vmatprep.mubr.bf16.mxu0 0
    %970 = vmatmul.mubr.bf16.gmra.mxu0 %v932
    %v971 = vpop.f32.mrf.mxu0
    %v972 = vadd.f32 0.0, %v971
    %v973 = vpop.f32.mrf.mxu0
    %v974 = vpop.f32.mrf.mxu0
    %v975 = vadd.f32 0.0, %v974
    %v976 = vpop.f32.mrf.mxu0
    %977 = vdwg.mxu0
    %v978 = vsel %vm467, %v972, -inf
    %979 = vmax.xlane.f32.xlu0 %v978
    %v980 = vpop.xlane.xlu0 %979
    %v981 = vsel %vm467, %v975, -inf
    %982 = vmax.xlane.f32.xlu0 %v981
    %v983 = vpop.xlane.xlu0 %982
    %v984 = vsub.f32 %v972, %v980
    %v985 = vsub.f32 %v975, %v983
    %v986 = vmul.f32 %v984, 1.442695
    %v987 = vpow.pop %v986
    %v988 = vmul.f32 %v985, 1.442695
    %v989 = vpow.pop %v988
    %v990 = vsel %vm467, %v987, 0.0
    %991 = vadd.xlane.f32.xlu0 %v990
    %v992 = vpop.xlane.xlu0 %991
    %v993 = vsel %vm467, %v989, 0.0
    %994 = vadd.xlane.f32.xlu0 %v993
    %v995 = vpop.xlane.xlu0 %994
    %v996 = vrcp.pop %v992
    %v997 = vrcp.pop %v995
    %v998 = vmul.f32 %v987, %v996
    %v999 = vmul.f32 %v989, %v997
    %v1000 = vpack.c.bf16 %v999, %v998
    %1001 = vrot.lane.b32.xlu0 %v418, 104
    %v1002 = vpop.permute.xlu0 %1001
    %v1005 = vsel %vm467, %v1000, 0
    %1007 = vmatprep.subr.bf16.mxu0 0
    %1008 = vmatpush1.bf16.msra.mxu0 0
    %1009 = vmatprep.subr.bf16.mxu0 0
    %1010 = vmatpush1.bf16.msra.mxu0 0
    %1011 = vmatprep.subr.bf16.mxu0 0
    %1012 = vmatpush1.bf16.msra.mxu0 0
    %1013 = vmatprep.subr.bf16.mxu0 0
    %1014 = vmatpush1.bf16.msra.mxu0 0
    %1015 = vmatprep.subr.bf16.mxu0 0
    %1016 = vmatpush1.bf16.msra.mxu0 0
    %1017 = vmatprep.subr.bf16.mxu0 0
    %1018 = vmatpush1.bf16.msra.mxu0 0
    %1019 = vmatprep.subr.bf16.mxu0 0
    %1020 = vmatpush1.bf16.msra.mxu0 0
    %1021 = vmatprep.subr.bf16.mxu0 0
    %1022 = vmatpush1.bf16.msra.mxu0 %v1002
    %1023 = vmatprep.subr.bf16.mxu0 0
    %1024 = vmatpush2.bf16.msra.mxu0 0
    %1025 = vmatprep.subr.bf16.mxu0 0
    %1026 = vmatpush2.bf16.msra.mxu0 0
    %1027 = vmatprep.subr.bf16.mxu0 0
    %1028 = vmatpush2.bf16.msra.mxu0 0
    %1029 = vmatprep.subr.bf16.mxu0 0
    %1030 = vmatpush2.bf16.msra.mxu0 0
    %1031 = vmatprep.subr.bf16.mxu0 0
    %1032 = vmatpush2.bf16.msra.mxu0 0
    %1033 = vmatprep.subr.bf16.mxu0 0
    %1034 = vmatpush2.bf16.msra.mxu0 0
    %1035 = vmatprep.subr.bf16.mxu0 0
    %1036 = vmatpush2.bf16.msra.mxu0 0
    %1037 = vmatprep.subr.bf16.mxu0 0
    %1038 = vmatpush2.bf16.msra.mxu0 0
    %1039 = vmatprep.mubr.bf16.mxu0 0
    %1040 = vmatmul.mubr.bf16.gmra.mxu0 %v1005
    %v1041 = vpop.f32.mrf.mxu0
    %v1042 = vadd.f32 0.0, %v1041
    %v1043 = vpop.f32.mrf.mxu0
    %v1044 = vpop.f32.mrf.mxu0
    %v1045 = vadd.f32 0.0, %v1044
    %v1046 = vpop.f32.mrf.mxu0
    %1047 = vdwg.mxu0
    %v1048 = vpack.c.bf16 %v1045, %v1042
    %v1050 = vsel %vm419, %v1048, 0
    %v1053 = vsel %vm664, %v412, 0
    %1055 = vmatprep.subr.bf16.mxu0 0
    %1056 = vmatpush1.bf16.msra.mxu0 0
    %1057 = vmatprep.subr.bf16.mxu0 0
    %1058 = vmatpush1.bf16.msra.mxu0 0
    %1059 = vmatprep.subr.bf16.mxu0 0
    %1060 = vmatpush1.bf16.msra.mxu0 0
    %1061 = vmatprep.subr.bf16.mxu0 0
    %1062 = vmatpush1.bf16.msra.mxu0 0
    %1063 = vmatprep.subr.bf16.mxu0 0
    %1064 = vmatpush1.bf16.msra.mxu0 0
    %1065 = vmatprep.subr.bf16.mxu0 0
    %1066 = vmatpush1.bf16.msra.mxu0 0
    %1067 = vmatprep.subr.bf16.mxu0 0
    %1068 = vmatpush1.bf16.msra.mxu0 0
    %1069 = vmatprep.subr.bf16.mxu0 0
    %1070 = vmatpush1.bf16.msra.mxu0 %v1053
    %1071 = vmatprep.subr.bf16.mxu0 0
    %1072 = vmatpush2.bf16.msra.mxu0 0
    %1073 = vmatprep.subr.bf16.mxu0 0
    %1074 = vmatpush2.bf16.msra.mxu0 0
    %1075 = vmatprep.subr.bf16.mxu0 0
    %1076 = vmatpush2.bf16.msra.mxu0 0
    %1077 = vmatprep.subr.bf16.mxu0 0
    %1078 = vmatpush2.bf16.msra.mxu0 0
    %1079 = vmatprep.subr.bf16.mxu0 0
    %1080 = vmatpush2.bf16.msra.mxu0 0
    %1081 = vmatprep.subr.bf16.mxu0 0
    %1082 = vmatpush2.bf16.msra.mxu0 0
    %1083 = vmatprep.subr.bf16.mxu0 0
    %1084 = vmatpush2.bf16.msra.mxu0 0
    %1085 = vmatprep.subr.bf16.mxu0 0
    %1086 = vmatpush2.bf16.msra.mxu0 0
    %1087 = vmatprep.mubr.bf16.mxu0 0
    %1088 = vmatmul.mubr.bf16.gmra.mxu0 %v1050
    %v1089 = vpop.f32.mrf.mxu0
    %v1090 = vadd.f32 0.0, %v1089
    %v1091 = vpop.f32.mrf.mxu0
    %v1092 = vpop.f32.mrf.mxu0
    %v1093 = vadd.f32 0.0, %v1092
    %v1094 = vpop.f32.mrf.mxu0
    %1095 = vdwg.mxu0
    %v1096 = vadd.f32 %v925, %v1090
    %v1097 = vadd.f32 %v926, %v1093
    %v1099 = vlaneseq
    %v1100 = vshrl.u32 %v1099, 7
    %v1101 = vsub.s32 0, %v1100
    %v1102 = vrot.slane %v413, %v1101
    %v1104 = vadd.f32 %v1096, %v1102
    %v1105 = vadd.f32 %v1097, %v1102
    %1106 = vst.msk [vmem:[#allocation17] sm:$0xff] %vm197, %v1104
    %1107 = vst.msk [vmem:[#allocation17 + $0x8] sm:$0xff] %vm197, %v1105
    %v1108 = vmul.f32 %v247, 0.35355338
    %v1109 = vmul.f32 %v250, 0.35355338
    %v1110 = vpack.c.bf16 %v1109, %v1108
    %v1111 = vpack.c.bf16 %v328, %v325
    %v1112 = vpack.c.bf16 %v406, %v403
    %v1114 = vsel %vm419, %v1110, 0
    %v1117 = vsel %vm419, %v1111, 0
    %1119 = vmatprep.subr.bf16.mxu0 0
    %1120 = vmatpush1.bf16.xpose.msra.mxu0 0
    %1121 = vmatprep.subr.bf16.mxu0 0
    %1122 = vmatpush1.bf16.xpose.msra.mxu0 0
    %1123 = vmatprep.subr.bf16.mxu0 0
    %1124 = vmatpush1.bf16.xpose.msra.mxu0 0
    %1125 = vmatprep.subr.bf16.mxu0 0
    %1126 = vmatpush1.bf16.xpose.msra.mxu0 0
    %1127 = vmatprep.subr.bf16.mxu0 0
    %1128 = vmatpush1.bf16.xpose.msra.mxu0 0
    %1129 = vmatprep.subr.bf16.mxu0 0
    %1130 = vmatpush1.bf16.xpose.msra.mxu0 0
    %1131 = vmatprep.subr.bf16.mxu0 0
    %1132 = vmatpush1.bf16.xpose.msra.mxu0 0
    %1133 = vmatprep.subr.bf16.mxu0 0
    %1134 = vmatpush1.bf16.xpose.msra.mxu0 %v1117
    %1135 = vmatprep.subr.bf16.mxu0 0
    %1136 = vmatpush2.bf16.xpose.msra.mxu0 0
    %1137 = vmatprep.subr.bf16.mxu0 0
    %1138 = vmatpush2.bf16.xpose.msra.mxu0 0
    %1139 = vmatprep.subr.bf16.mxu0 0
    %1140 = vmatpush2.bf16.xpose.msra.mxu0 0
    %1141 = vmatprep.subr.bf16.mxu0 0
    %1142 = vmatpush2.bf16.xpose.msra.mxu0 0
    %1143 = vmatprep.subr.bf16.mxu0 0
    %1144 = vmatpush2.bf16.xpose.msra.mxu0 0
    %1145 = vmatprep.subr.bf16.mxu0 0
    %1146 = vmatpush2.bf16.xpose.msra.mxu0 0
    %1147 = vmatprep.subr.bf16.mxu0 0
    %1148 = vmatpush2.bf16.xpose.msra.mxu0 0
    %1149 = vmatprep.subr.bf16.mxu0 0
    %1150 = vmatpush2.bf16.xpose.msra.mxu0 0
    %1151 = vmatprep.mubr.bf16.mxu0 0
    %1152 = vmatmul.mubr.bf16.gmra.mxu0 %v1114
    %v1153 = vpop.f32.mrf.mxu0
    %v1154 = vadd.f32 0.0, %v1153
    %v1155 = vpop.f32.mrf.mxu0
    %v1156 = vpop.f32.mrf.mxu0
    %v1157 = vadd.f32 0.0, %v1156
    %v1158 = vpop.f32.mrf.mxu0
    %1159 = vdwg.mxu0
    %v1160 = vsel %vm467, %v1154, -inf
    %1161 = vmax.xlane.f32.xlu0 %v1160
    %v1162 = vpop.xlane.xlu0 %1161
    %v1163 = vsel %vm467, %v1157, -inf
    %1164 = vmax.xlane.f32.xlu0 %v1163
    %v1165 = vpop.xlane.xlu0 %1164
    %v1166 = vsub.f32 %v1154, %v1162
    %v1167 = vsub.f32 %v1157, %v1165
    %v1168 = vmul.f32 %v1166, 1.442695
    %v1169 = vpow.pop %v1168
    %v1170 = vmul.f32 %v1167, 1.442695
    %v1171 = vpow.pop %v1170
    %v1172 = vsel %vm467, %v1169, 0.0
    %1173 = vadd.xlane.f32.xlu0 %v1172
    %v1174 = vpop.xlane.xlu0 %1173
    %v1175 = vsel %vm467, %v1171, 0.0
    %1176 = vadd.xlane.f32.xlu0 %v1175
    %v1177 = vpop.xlane.xlu0 %1176
    %v1178 = vrcp.pop %v1174
    %v1179 = vrcp.pop %v1177
    %v1180 = vmul.f32 %v1169, %v1178
    %v1181 = vmul.f32 %v1171, %v1179
    %v1182 = vpack.c.bf16 %v1181, %v1180
    %v1184 = vsel %vm467, %v1182, 0
    %1186 = vmatprep.subr.bf16.mxu0 0
    %1187 = vmatpush1.bf16.msra.mxu0 0
    %1188 = vmatprep.subr.bf16.mxu0 0
    %1189 = vmatpush1.bf16.msra.mxu0 0
    %1190 = vmatprep.subr.bf16.mxu0 0
    %1191 = vmatpush1.bf16.msra.mxu0 0
    %1192 = vmatprep.subr.bf16.mxu0 0
    %1193 = vmatpush1.bf16.msra.mxu0 0
    %1194 = vmatprep.subr.bf16.mxu0 0
    %1195 = vmatpush1.bf16.msra.mxu0 0
    %1196 = vmatprep.subr.bf16.mxu0 0
    %1197 = vmatpush1.bf16.msra.mxu0 0
    %1198 = vmatprep.subr.bf16.mxu0 0
    %1199 = vmatpush1.bf16.msra.mxu0 0
    %1200 = vmatprep.subr.bf16.mxu0 0
    %1201 = vmatpush1.bf16.msra.mxu0 %v1112
    %1202 = vmatprep.subr.bf16.mxu0 0
    %1203 = vmatpush2.bf16.msra.mxu0 0
    %1204 = vmatprep.subr.bf16.mxu0 0
    %1205 = vmatpush2.bf16.msra.mxu0 0
    %1206 = vmatprep.subr.bf16.mxu0 0
    %1207 = vmatpush2.bf16.msra.mxu0 0
    %1208 = vmatprep.subr.bf16.mxu0 0
    %1209 = vmatpush2.bf16.msra.mxu0 0
    %1210 = vmatprep.subr.bf16.mxu0 0
    %1211 = vmatpush2.bf16.msra.mxu0 0
    %1212 = vmatprep.subr.bf16.mxu0 0
    %1213 = vmatpush2.bf16.msra.mxu0 0
    %1214 = vmatprep.subr.bf16.mxu0 0
    %1215 = vmatpush2.bf16.msra.mxu0 0
    %1216 = vmatprep.subr.bf16.mxu0 0
    %1217 = vmatpush2.bf16.msra.mxu0 0
    %1218 = vmatprep.mubr.bf16.mxu0 0
    %1219 = vmatmul.mubr.bf16.gmra.mxu0 %v1184
    %v1220 = vpop.f32.mrf.mxu0
    %v1221 = vadd.f32 0.0, %v1220
    %v1222 = vpop.f32.mrf.mxu0
    %v1223 = vpop.f32.mrf.mxu0
    %v1224 = vadd.f32 0.0, %v1223
    %v1225 = vpop.f32.mrf.mxu0
    %1226 = vdwg.mxu0
    %v1227 = vpack.c.bf16 %v1224, %v1221
    %1229 = vrot.lane.b32.xlu0 %v1110, 120
    %v1230 = vpop.permute.xlu0 %1229
    %1232 = vrot.lane.b32.xlu0 %v1111, 120
    %v1233 = vpop.permute.xlu0 %1232
    %v1235 = vsel %vm419, %v1230, 0
    %v1238 = vsel %vm419, %v1233, 0
    %1240 = vmatprep.subr.bf16.mxu0 0
    %1241 = vmatpush1.bf16.xpose.msra.mxu0 0
    %1242 = vmatprep.subr.bf16.mxu0 0
    %1243 = vmatpush1.bf16.xpose.msra.mxu0 0
    %1244 = vmatprep.subr.bf16.mxu0 0
    %1245 = vmatpush1.bf16.xpose.msra.mxu0 0
    %1246 = vmatprep.subr.bf16.mxu0 0
    %1247 = vmatpush1.bf16.xpose.msra.mxu0 0
    %1248 = vmatprep.subr.bf16.mxu0 0
    %1249 = vmatpush1.bf16.xpose.msra.mxu0 0
    %1250 = vmatprep.subr.bf16.mxu0 0
    %1251 = vmatpush1.bf16.xpose.msra.mxu0 0
    %1252 = vmatprep.subr.bf16.mxu0 0
    %1253 = vmatpush1.bf16.xpose.msra.mxu0 0
    %1254 = vmatprep.subr.bf16.mxu0 0
    %1255 = vmatpush1.bf16.xpose.msra.mxu0 %v1238
    %1256 = vmatprep.subr.bf16.mxu0 0
    %1257 = vmatpush2.bf16.xpose.msra.mxu0 0
    %1258 = vmatprep.subr.bf16.mxu0 0
    %1259 = vmatpush2.bf16.xpose.msra.mxu0 0
    %1260 = vmatprep.subr.bf16.mxu0 0
    %1261 = vmatpush2.bf16.xpose.msra.mxu0 0
    %1262 = vmatprep.subr.bf16.mxu0 0
    %1263 = vmatpush2.bf16.xpose.msra.mxu0 0
    %1264 = vmatprep.subr.bf16.mxu0 0
    %1265 = vmatpush2.bf16.xpose.msra.mxu0 0
    %1266 = vmatprep.subr.bf16.mxu0 0
    %1267 = vmatpush2.bf16.xpose.msra.mxu0 0
    %1268 = vmatprep.subr.bf16.mxu0 0
    %1269 = vmatpush2.bf16.xpose.msra.mxu0 0
    %1270 = vmatprep.subr.bf16.mxu0 0
    %1271 = vmatpush2.bf16.xpose.msra.mxu0 0
    %1272 = vmatprep.mubr.bf16.mxu0 0
    %1273 = vmatmul.mubr.bf16.gmra.mxu0 %v1235
    %v1274 = vpop.f32.mrf.mxu0
    %v1275 = vadd.f32 0.0, %v1274
    %v1276 = vpop.f32.mrf.mxu0
    %v1277 = vpop.f32.mrf.mxu0
    %v1278 = vadd.f32 0.0, %v1277
    %v1279 = vpop.f32.mrf.mxu0
    %1280 = vdwg.mxu0
    %v1281 = vsel %vm467, %v1275, -inf
    %1282 = vmax.xlane.f32.xlu0 %v1281
    %v1283 = vpop.xlane.xlu0 %1282
    %v1284 = vsel %vm467, %v1278, -inf
    %1285 = vmax.xlane.f32.xlu0 %v1284
    %v1286 = vpop.xlane.xlu0 %1285
    %v1287 = vsub.f32 %v1275, %v1283
    %v1288 = vsub.f32 %v1278, %v1286
    %v1289 = vmul.f32 %v1287, 1.442695
    %v1290 = vpow.pop %v1289
    %v1291 = vmul.f32 %v1288, 1.442695
    %v1292 = vpow.pop %v1291
    %v1293 = vsel %vm467, %v1290, 0.0
    %1294 = vadd.xlane.f32.xlu0 %v1293
    %v1295 = vpop.xlane.xlu0 %1294
    %v1296 = vsel %vm467, %v1292, 0.0
    %1297 = vadd.xlane.f32.xlu0 %v1296
    %v1298 = vpop.xlane.xlu0 %1297
    %v1299 = vrcp.pop %v1295
    %v1300 = vrcp.pop %v1298
    %v1301 = vmul.f32 %v1290, %v1299
    %v1302 = vmul.f32 %v1292, %v1300
    %v1303 = vpack.c.bf16 %v1302, %v1301
    %1305 = vrot.lane.b32.xlu0 %v1112, 120
    %v1306 = vpop.permute.xlu0 %1305
    %v1309 = vsel %vm467, %v1303, 0
    %1311 = vmatprep.subr.bf16.mxu0 0
    %1312 = vmatpush1.bf16.msra.mxu0 0
    %1313 = vmatprep.subr.bf16.mxu0 0
    %1314 = vmatpush1.bf16.msra.mxu0 0
    %1315 = vmatprep.subr.bf16.mxu0 0
    %1316 = vmatpush1.bf16.msra.mxu0 0
    %1317 = vmatprep.subr.bf16.mxu0 0
    %1318 = vmatpush1.bf16.msra.mxu0 0
    %1319 = vmatprep.subr.bf16.mxu0 0
    %1320 = vmatpush1.bf16.msra.mxu0 0
    %1321 = vmatprep.subr.bf16.mxu0 0
    %1322 = vmatpush1.bf16.msra.mxu0 0
    %1323 = vmatprep.subr.bf16.mxu0 0
    %1324 = vmatpush1.bf16.msra.mxu0 0
    %1325 = vmatprep.subr.bf16.mxu0 0
    %1326 = vmatpush1.bf16.msra.mxu0 %v1306
    %1327 = vmatprep.subr.bf16.mxu0 0
    %1328 = vmatpush2.bf16.msra.mxu0 0
    %1329 = vmatprep.subr.bf16.mxu0 0
    %1330 = vmatpush2.bf16.msra.mxu0 0
    %1331 = vmatprep.subr.bf16.mxu0 0
    %1332 = vmatpush2.bf16.msra.mxu0 0
    %1333 = vmatprep.subr.bf16.mxu0 0
    %1334 = vmatpush2.bf16.msra.mxu0 0
    %1335 = vmatprep.subr.bf16.mxu0 0
    %1336 = vmatpush2.bf16.msra.mxu0 0
    %1337 = vmatprep.subr.bf16.mxu0 0
    %1338 = vmatpush2.bf16.msra.mxu0 0
    %1339 = vmatprep.subr.bf16.mxu0 0
    %1340 = vmatpush2.bf16.msra.mxu0 0
    %1341 = vmatprep.subr.bf16.mxu0 0
    %1342 = vmatpush2.bf16.msra.mxu0 0
    %1343 = vmatprep.mubr.bf16.mxu0 0
    %1344 = vmatmul.mubr.bf16.gmra.mxu0 %v1309
    %v1345 = vpop.f32.mrf.mxu0
    %v1346 = vadd.f32 0.0, %v1345
    %v1347 = vpop.f32.mrf.mxu0
    %v1348 = vpop.f32.mrf.mxu0
    %v1349 = vadd.f32 0.0, %v1348
    %v1350 = vpop.f32.mrf.mxu0
    %1351 = vdwg.mxu0
    %v1352 = vpack.c.bf16 %v1349, %v1346
    %v1354 = vsel %vm419, %v1352, 0
    %1356 = vmatprep.subr.bf16.mxu0 0
    %1357 = vmatpush1.bf16.msra.mxu0 0
    %1358 = vmatprep.subr.bf16.mxu0 0
    %1359 = vmatpush1.bf16.msra.mxu0 0
    %1360 = vmatprep.subr.bf16.mxu0 0
    %1361 = vmatpush1.bf16.msra.mxu0 0
    %1362 = vmatprep.subr.bf16.mxu0 0
    %1363 = vmatpush1.bf16.msra.mxu0 0
    %1364 = vmatprep.subr.bf16.mxu0 0
    %1365 = vmatpush1.bf16.msra.mxu0 0
    %1366 = vmatprep.subr.bf16.mxu0 0
    %1367 = vmatpush1.bf16.msra.mxu0 0
    %1368 = vmatprep.subr.bf16.mxu0 0
    %1369 = vmatpush1.bf16.msra.mxu0 0
    %1370 = vmatprep.subr.bf16.mxu0 0
    %1371 = vmatpush1.bf16.msra.mxu0 %v666
    %1372 = vmatprep.subr.bf16.mxu0 0
    %1373 = vmatpush2.bf16.msra.mxu0 0
    %1374 = vmatprep.subr.bf16.mxu0 0
    %1375 = vmatpush2.bf16.msra.mxu0 0
    %1376 = vmatprep.subr.bf16.mxu0 0
    %1377 = vmatpush2.bf16.msra.mxu0 0
    %1378 = vmatprep.subr.bf16.mxu0 0
    %1379 = vmatpush2.bf16.msra.mxu0 0
    %1380 = vmatprep.subr.bf16.mxu0 0
    %1381 = vmatpush2.bf16.msra.mxu0 0
    %1382 = vmatprep.subr.bf16.mxu0 0
    %1383 = vmatpush2.bf16.msra.mxu0 0
    %1384 = vmatprep.subr.bf16.mxu0 0
    %1385 = vmatpush2.bf16.msra.mxu0 0
    %1386 = vmatprep.subr.bf16.mxu0 0
    %1387 = vmatpush2.bf16.msra.mxu0 0
    %1388 = vmatprep.mubr.bf16.mxu0 0
    %1389 = vmatmul.mubr.bf16.gmra.mxu0 %v1354
    %v1390 = vpop.f32.mrf.mxu0
    %v1391 = vadd.f32 0.0, %v1390
    %v1392 = vpop.f32.mrf.mxu0
    %v1393 = vpop.f32.mrf.mxu0
    %v1394 = vadd.f32 0.0, %v1393
    %v1395 = vpop.f32.mrf.mxu0
    %1396 = vdwg.mxu0
    %v1398 = vsel %vm419, %v1227, 0
    %1400 = vmatprep.subr.bf16.mxu0 0
    %1401 = vmatpush1.bf16.msra.mxu0 0
    %1402 = vmatprep.subr.bf16.mxu0 0
    %1403 = vmatpush1.bf16.msra.mxu0 0
    %1404 = vmatprep.subr.bf16.mxu0 0
    %1405 = vmatpush1.bf16.msra.mxu0 0
    %1406 = vmatprep.subr.bf16.mxu0 0
    %1407 = vmatpush1.bf16.msra.mxu0 0
    %1408 = vmatprep.subr.bf16.mxu0 0
    %1409 = vmatpush1.bf16.msra.mxu0 0
    %1410 = vmatprep.subr.bf16.mxu0 0
    %1411 = vmatpush1.bf16.msra.mxu0 0
    %1412 = vmatprep.subr.bf16.mxu0 0
    %1413 = vmatpush1.bf16.msra.mxu0 0
    %1414 = vmatprep.subr.bf16.mxu0 0
    %1415 = vmatpush1.bf16.msra.mxu0 %v713
    %1416 = vmatprep.subr.bf16.mxu0 0
    %1417 = vmatpush2.bf16.msra.mxu0 0
    %1418 = vmatprep.subr.bf16.mxu0 0
    %1419 = vmatpush2.bf16.msra.mxu0 0
    %1420 = vmatprep.subr.bf16.mxu0 0
    %1421 = vmatpush2.bf16.msra.mxu0 0
    %1422 = vmatprep.subr.bf16.mxu0 0
    %1423 = vmatpush2.bf16.msra.mxu0 0
    %1424 = vmatprep.subr.bf16.mxu0 0
    %1425 = vmatpush2.bf16.msra.mxu0 0
    %1426 = vmatprep.subr.bf16.mxu0 0
    %1427 = vmatpush2.bf16.msra.mxu0 0
    %1428 = vmatprep.subr.bf16.mxu0 0
    %1429 = vmatpush2.bf16.msra.mxu0 0
    %1430 = vmatprep.subr.bf16.mxu0 0
    %1431 = vmatpush2.bf16.msra.mxu0 0
    %1432 = vmatprep.mubr.bf16.mxu0 0
    %1433 = vmatmul.mubr.bf16.gmra.mxu0 %v1398
    %v1434 = vpop.f32.mrf.mxu0
    %v1435 = vadd.f32 %v1391, %v1434
    %v1436 = vpop.f32.mrf.mxu0
    %v1437 = vpop.f32.mrf.mxu0
    %v1438 = vadd.f32 %v1394, %v1437
    %v1439 = vpop.f32.mrf.mxu0
    %1440 = vdwg.mxu0
    %1441 = vrot.lane.b32.xlu0 %v1110, 112
    %v1442 = vpop.permute.xlu0 %1441
    %1443 = vrot.lane.b32.xlu0 %v1111, 112
    %v1444 = vpop.permute.xlu0 %1443
    %v1446 = vsel %vm419, %v1442, 0
    %v1449 = vsel %vm419, %v1444, 0
    %1451 = vmatprep.subr.bf16.mxu0 0
    %1452 = vmatpush1.bf16.xpose.msra.mxu0 0
    %1453 = vmatprep.subr.bf16.mxu0 0
    %1454 = vmatpush1.bf16.xpose.msra.mxu0 0
    %1455 = vmatprep.subr.bf16.mxu0 0
    %1456 = vmatpush1.bf16.xpose.msra.mxu0 0
    %1457 = vmatprep.subr.bf16.mxu0 0
    %1458 = vmatpush1.bf16.xpose.msra.mxu0 0
    %1459 = vmatprep.subr.bf16.mxu0 0
    %1460 = vmatpush1.bf16.xpose.msra.mxu0 0
    %1461 = vmatprep.subr.bf16.mxu0 0
    %1462 = vmatpush1.bf16.xpose.msra.mxu0 0
    %1463 = vmatprep.subr.bf16.mxu0 0
    %1464 = vmatpush1.bf16.xpose.msra.mxu0 0
    %1465 = vmatprep.subr.bf16.mxu0 0
    %1466 = vmatpush1.bf16.xpose.msra.mxu0 %v1449
    %1467 = vmatprep.subr.bf16.mxu0 0
    %1468 = vmatpush2.bf16.xpose.msra.mxu0 0
    %1469 = vmatprep.subr.bf16.mxu0 0
    %1470 = vmatpush2.bf16.xpose.msra.mxu0 0
    %1471 = vmatprep.subr.bf16.mxu0 0
    %1472 = vmatpush2.bf16.xpose.msra.mxu0 0
    %1473 = vmatprep.subr.bf16.mxu0 0
    %1474 = vmatpush2.bf16.xpose.msra.mxu0 0
    %1475 = vmatprep.subr.bf16.mxu0 0
    %1476 = vmatpush2.bf16.xpose.msra.mxu0 0
    %1477 = vmatprep.subr.bf16.mxu0 0
    %1478 = vmatpush2.bf16.xpose.msra.mxu0 0
    %1479 = vmatprep.subr.bf16.mxu0 0
    %1480 = vmatpush2.bf16.xpose.msra.mxu0 0
    %1481 = vmatprep.subr.bf16.mxu0 0
    %1482 = vmatpush2.bf16.xpose.msra.mxu0 0
    %1483 = vmatprep.mubr.bf16.mxu0 0
    %1484 = vmatmul.mubr.bf16.gmra.mxu0 %v1446
    %v1485 = vpop.f32.mrf.mxu0
    %v1486 = vadd.f32 0.0, %v1485
    %v1487 = vpop.f32.mrf.mxu0
    %v1488 = vpop.f32.mrf.mxu0
    %v1489 = vadd.f32 0.0, %v1488
    %v1490 = vpop.f32.mrf.mxu0
    %1491 = vdwg.mxu0
    %v1492 = vsel %vm467, %v1486, -inf
    %1493 = vmax.xlane.f32.xlu0 %v1492
    %v1494 = vpop.xlane.xlu0 %1493
    %v1495 = vsel %vm467, %v1489, -inf
    %1496 = vmax.xlane.f32.xlu0 %v1495
    %v1497 = vpop.xlane.xlu0 %1496
    %v1498 = vsub.f32 %v1486, %v1494
    %v1499 = vsub.f32 %v1489, %v1497
    %v1500 = vmul.f32 %v1498, 1.442695
    %v1501 = vpow.pop %v1500
    %v1502 = vmul.f32 %v1499, 1.442695
    %v1503 = vpow.pop %v1502
    %v1504 = vsel %vm467, %v1501, 0.0
    %1505 = vadd.xlane.f32.xlu0 %v1504
    %v1506 = vpop.xlane.xlu0 %1505
    %v1507 = vsel %vm467, %v1503, 0.0
    %1508 = vadd.xlane.f32.xlu0 %v1507
    %v1509 = vpop.xlane.xlu0 %1508
    %v1510 = vrcp.pop %v1506
    %v1511 = vrcp.pop %v1509
    %v1512 = vmul.f32 %v1501, %v1510
    %v1513 = vmul.f32 %v1503, %v1511
    %v1514 = vpack.c.bf16 %v1513, %v1512
    %1515 = vrot.lane.b32.xlu0 %v1112, 112
    %v1516 = vpop.permute.xlu0 %1515
    %v1519 = vsel %vm467, %v1514, 0
    %1521 = vmatprep.subr.bf16.mxu0 0
    %1522 = vmatpush1.bf16.msra.mxu0 0
    %1523 = vmatprep.subr.bf16.mxu0 0
    %1524 = vmatpush1.bf16.msra.mxu0 0
    %1525 = vmatprep.subr.bf16.mxu0 0
    %1526 = vmatpush1.bf16.msra.mxu0 0
    %1527 = vmatprep.subr.bf16.mxu0 0
    %1528 = vmatpush1.bf16.msra.mxu0 0
    %1529 = vmatprep.subr.bf16.mxu0 0
    %1530 = vmatpush1.bf16.msra.mxu0 0
    %1531 = vmatprep.subr.bf16.mxu0 0
    %1532 = vmatpush1.bf16.msra.mxu0 0
    %1533 = vmatprep.subr.bf16.mxu0 0
    %1534 = vmatpush1.bf16.msra.mxu0 0
    %1535 = vmatprep.subr.bf16.mxu0 0
    %1536 = vmatpush1.bf16.msra.mxu0 %v1516
    %1537 = vmatprep.subr.bf16.mxu0 0
    %1538 = vmatpush2.bf16.msra.mxu0 0
    %1539 = vmatprep.subr.bf16.mxu0 0
    %1540 = vmatpush2.bf16.msra.mxu0 0
    %1541 = vmatprep.subr.bf16.mxu0 0
    %1542 = vmatpush2.bf16.msra.mxu0 0
    %1543 = vmatprep.subr.bf16.mxu0 0
    %1544 = vmatpush2.bf16.msra.mxu0 0
    %1545 = vmatprep.subr.bf16.mxu0 0
    %1546 = vmatpush2.bf16.msra.mxu0 0
    %1547 = vmatprep.subr.bf16.mxu0 0
    %1548 = vmatpush2.bf16.msra.mxu0 0
    %1549 = vmatprep.subr.bf16.mxu0 0
    %1550 = vmatpush2.bf16.msra.mxu0 0
    %1551 = vmatprep.subr.bf16.mxu0 0
    %1552 = vmatpush2.bf16.msra.mxu0 0
    %1553 = vmatprep.mubr.bf16.mxu0 0
    %1554 = vmatmul.mubr.bf16.gmra.mxu0 %v1519
    %v1555 = vpop.f32.mrf.mxu0
    %v1556 = vadd.f32 0.0, %v1555
    %v1557 = vpop.f32.mrf.mxu0
    %v1558 = vpop.f32.mrf.mxu0
    %v1559 = vadd.f32 0.0, %v1558
    %v1560 = vpop.f32.mrf.mxu0
    %1561 = vdwg.mxu0
    %v1562 = vpack.c.bf16 %v1559, %v1556
    %v1564 = vsel %vm419, %v1562, 0
    %1566 = vmatprep.subr.bf16.mxu0 0
    %1567 = vmatpush1.bf16.msra.mxu0 0
    %1568 = vmatprep.subr.bf16.mxu0 0
    %1569 = vmatpush1.bf16.msra.mxu0 0
    %1570 = vmatprep.subr.bf16.mxu0 0
    %1571 = vmatpush1.bf16.msra.mxu0 0
    %1572 = vmatprep.subr.bf16.mxu0 0
    %1573 = vmatpush1.bf16.msra.mxu0 0
    %1574 = vmatprep.subr.bf16.mxu0 0
    %1575 = vmatpush1.bf16.msra.mxu0 0
    %1576 = vmatprep.subr.bf16.mxu0 0
    %1577 = vmatpush1.bf16.msra.mxu0 0
    %1578 = vmatprep.subr.bf16.mxu0 0
    %1579 = vmatpush1.bf16.msra.mxu0 0
    %1580 = vmatprep.subr.bf16.mxu0 0
    %1581 = vmatpush1.bf16.msra.mxu0 %v882
    %1582 = vmatprep.subr.bf16.mxu0 0
    %1583 = vmatpush2.bf16.msra.mxu0 0
    %1584 = vmatprep.subr.bf16.mxu0 0
    %1585 = vmatpush2.bf16.msra.mxu0 0
    %1586 = vmatprep.subr.bf16.mxu0 0
    %1587 = vmatpush2.bf16.msra.mxu0 0
    %1588 = vmatprep.subr.bf16.mxu0 0
    %1589 = vmatpush2.bf16.msra.mxu0 0
    %1590 = vmatprep.subr.bf16.mxu0 0
    %1591 = vmatpush2.bf16.msra.mxu0 0
    %1592 = vmatprep.subr.bf16.mxu0 0
    %1593 = vmatpush2.bf16.msra.mxu0 0
    %1594 = vmatprep.subr.bf16.mxu0 0
    %1595 = vmatpush2.bf16.msra.mxu0 0
    %1596 = vmatprep.subr.bf16.mxu0 0
    %1597 = vmatpush2.bf16.msra.mxu0 0
    %1598 = vmatprep.mubr.bf16.mxu0 0
    %1599 = vmatmul.mubr.bf16.gmra.mxu0 %v1564
    %v1600 = vpop.f32.mrf.mxu0
    %v1601 = vadd.f32 0.0, %v1600
    %v1602 = vpop.f32.mrf.mxu0
    %v1603 = vpop.f32.mrf.mxu0
    %v1604 = vadd.f32 0.0, %v1603
    %v1605 = vpop.f32.mrf.mxu0
    %1606 = vdwg.mxu0
    %v1607 = vadd.f32 %v1435, %v1601
    %v1608 = vadd.f32 %v1438, %v1604
    %1609 = vrot.lane.b32.xlu0 %v1110, 104
    %v1610 = vpop.permute.xlu0 %1609
    %1611 = vrot.lane.b32.xlu0 %v1111, 104
    %v1612 = vpop.permute.xlu0 %1611
    %v1614 = vsel %vm419, %v1610, 0
    %v1617 = vsel %vm419, %v1612, 0
    %1619 = vmatprep.subr.bf16.mxu0 0
    %1620 = vmatpush1.bf16.xpose.msra.mxu0 0
    %1621 = vmatprep.subr.bf16.mxu0 0
    %1622 = vmatpush1.bf16.xpose.msra.mxu0 0
    %1623 = vmatprep.subr.bf16.mxu0 0
    %1624 = vmatpush1.bf16.xpose.msra.mxu0 0
    %1625 = vmatprep.subr.bf16.mxu0 0
    %1626 = vmatpush1.bf16.xpose.msra.mxu0 0
    %1627 = vmatprep.subr.bf16.mxu0 0
    %1628 = vmatpush1.bf16.xpose.msra.mxu0 0
    %1629 = vmatprep.subr.bf16.mxu0 0
    %1630 = vmatpush1.bf16.xpose.msra.mxu0 0
    %1631 = vmatprep.subr.bf16.mxu0 0
    %1632 = vmatpush1.bf16.xpose.msra.mxu0 0
    %1633 = vmatprep.subr.bf16.mxu0 0
    %1634 = vmatpush1.bf16.xpose.msra.mxu0 %v1617
    %1635 = vmatprep.subr.bf16.mxu0 0
    %1636 = vmatpush2.bf16.xpose.msra.mxu0 0
    %1637 = vmatprep.subr.bf16.mxu0 0
    %1638 = vmatpush2.bf16.xpose.msra.mxu0 0
    %1639 = vmatprep.subr.bf16.mxu0 0
    %1640 = vmatpush2.bf16.xpose.msra.mxu0 0
    %1641 = vmatprep.subr.bf16.mxu0 0
    %1642 = vmatpush2.bf16.xpose.msra.mxu0 0
    %1643 = vmatprep.subr.bf16.mxu0 0
    %1644 = vmatpush2.bf16.xpose.msra.mxu0 0
    %1645 = vmatprep.subr.bf16.mxu0 0
    %1646 = vmatpush2.bf16.xpose.msra.mxu0 0
    %1647 = vmatprep.subr.bf16.mxu0 0
    %1648 = vmatpush2.bf16.xpose.msra.mxu0 0
    %1649 = vmatprep.subr.bf16.mxu0 0
    %1650 = vmatpush2.bf16.xpose.msra.mxu0 0
    %1651 = vmatprep.mubr.bf16.mxu0 0
    %1652 = vmatmul.mubr.bf16.gmra.mxu0 %v1614
    %v1653 = vpop.f32.mrf.mxu0
    %v1654 = vadd.f32 0.0, %v1653
    %v1655 = vpop.f32.mrf.mxu0
    %v1656 = vpop.f32.mrf.mxu0
    %v1657 = vadd.f32 0.0, %v1656
    %v1658 = vpop.f32.mrf.mxu0
    %1659 = vdwg.mxu0
    %v1660 = vsel %vm467, %v1654, -inf
    %1661 = vmax.xlane.f32.xlu0 %v1660
    %v1662 = vpop.xlane.xlu0 %1661
    %v1663 = vsel %vm467, %v1657, -inf
    %1664 = vmax.xlane.f32.xlu0 %v1663
    %v1665 = vpop.xlane.xlu0 %1664
    %v1666 = vsub.f32 %v1654, %v1662
    %v1667 = vsub.f32 %v1657, %v1665
    %v1668 = vmul.f32 %v1666, 1.442695
    %v1669 = vpow.pop %v1668
    %v1670 = vmul.f32 %v1667, 1.442695
    %v1671 = vpow.pop %v1670
    %v1672 = vsel %vm467, %v1669, 0.0
    %1673 = vadd.xlane.f32.xlu0 %v1672
    %v1674 = vpop.xlane.xlu0 %1673
    %v1675 = vsel %vm467, %v1671, 0.0
    %1676 = vadd.xlane.f32.xlu0 %v1675
    %v1677 = vpop.xlane.xlu0 %1676
    %v1678 = vrcp.pop %v1674
    %v1679 = vrcp.pop %v1677
    %v1680 = vmul.f32 %v1669, %v1678
    %v1681 = vmul.f32 %v1671, %v1679
    %v1682 = vpack.c.bf16 %v1681, %v1680
    %1683 = vrot.lane.b32.xlu0 %v1112, 104
    %v1684 = vpop.permute.xlu0 %1683
    %v1687 = vsel %vm467, %v1682, 0
    %1689 = vmatprep.subr.bf16.mxu0 0
    %1690 = vmatpush1.bf16.msra.mxu0 0
    %1691 = vmatprep.subr.bf16.mxu0 0
    %1692 = vmatpush1.bf16.msra.mxu0 0
    %1693 = vmatprep.subr.bf16.mxu0 0
    %1694 = vmatpush1.bf16.msra.mxu0 0
    %1695 = vmatprep.subr.bf16.mxu0 0
    %1696 = vmatpush1.bf16.msra.mxu0 0
    %1697 = vmatprep.subr.bf16.mxu0 0
    %1698 = vmatpush1.bf16.msra.mxu0 0
    %1699 = vmatprep.subr.bf16.mxu0 0
    %1700 = vmatpush1.bf16.msra.mxu0 0
    %1701 = vmatprep.subr.bf16.mxu0 0
    %1702 = vmatpush1.bf16.msra.mxu0 0
    %1703 = vmatprep.subr.bf16.mxu0 0
    %1704 = vmatpush1.bf16.msra.mxu0 %v1684
    %1705 = vmatprep.subr.bf16.mxu0 0
    %1706 = vmatpush2.bf16.msra.mxu0 0
    %1707 = vmatprep.subr.bf16.mxu0 0
    %1708 = vmatpush2.bf16.msra.mxu0 0
    %1709 = vmatprep.subr.bf16.mxu0 0
    %1710 = vmatpush2.bf16.msra.mxu0 0
    %1711 = vmatprep.subr.bf16.mxu0 0
    %1712 = vmatpush2.bf16.msra.mxu0 0
    %1713 = vmatprep.subr.bf16.mxu0 0
    %1714 = vmatpush2.bf16.msra.mxu0 0
    %1715 = vmatprep.subr.bf16.mxu0 0
    %1716 = vmatpush2.bf16.msra.mxu0 0
    %1717 = vmatprep.subr.bf16.mxu0 0
    %1718 = vmatpush2.bf16.msra.mxu0 0
    %1719 = vmatprep.subr.bf16.mxu0 0
    %1720 = vmatpush2.bf16.msra.mxu0 0
    %1721 = vmatprep.mubr.bf16.mxu0 0
    %1722 = vmatmul.mubr.bf16.gmra.mxu0 %v1687
    %v1723 = vpop.f32.mrf.mxu0
    %v1724 = vadd.f32 0.0, %v1723
    %v1725 = vpop.f32.mrf.mxu0
    %v1726 = vpop.f32.mrf.mxu0
    %v1727 = vadd.f32 0.0, %v1726
    %v1728 = vpop.f32.mrf.mxu0
    %1729 = vdwg.mxu0
    %v1730 = vpack.c.bf16 %v1727, %v1724
    %v1732 = vsel %vm419, %v1730, 0
    %1734 = vmatprep.subr.bf16.mxu0 0
    %1735 = vmatpush1.bf16.msra.mxu0 0
    %1736 = vmatprep.subr.bf16.mxu0 0
    %1737 = vmatpush1.bf16.msra.mxu0 0
    %1738 = vmatprep.subr.bf16.mxu0 0
    %1739 = vmatpush1.bf16.msra.mxu0 0
    %1740 = vmatprep.subr.bf16.mxu0 0
    %1741 = vmatpush1.bf16.msra.mxu0 0
    %1742 = vmatprep.subr.bf16.mxu0 0
    %1743 = vmatpush1.bf16.msra.mxu0 0
    %1744 = vmatprep.subr.bf16.mxu0 0
    %1745 = vmatpush1.bf16.msra.mxu0 0
    %1746 = vmatprep.subr.bf16.mxu0 0
    %1747 = vmatpush1.bf16.msra.mxu0 0
    %1748 = vmatprep.subr.bf16.mxu0 0
    %1749 = vmatpush1.bf16.msra.mxu0 %v1053
    %1750 = vmatprep.subr.bf16.mxu0 0
    %1751 = vmatpush2.bf16.msra.mxu0 0
    %1752 = vmatprep.subr.bf16.mxu0 0
    %1753 = vmatpush2.bf16.msra.mxu0 0
    %1754 = vmatprep.subr.bf16.mxu0 0
    %1755 = vmatpush2.bf16.msra.mxu0 0
    %1756 = vmatprep.subr.bf16.mxu0 0
    %1757 = vmatpush2.bf16.msra.mxu0 0
    %1758 = vmatprep.subr.bf16.mxu0 0
    %1759 = vmatpush2.bf16.msra.mxu0 0
    %1760 = vmatprep.subr.bf16.mxu0 0
    %1761 = vmatpush2.bf16.msra.mxu0 0
    %1762 = vmatprep.subr.bf16.mxu0 0
    %1763 = vmatpush2.bf16.msra.mxu0 0
    %1764 = vmatprep.subr.bf16.mxu0 0
    %1765 = vmatpush2.bf16.msra.mxu0 0
    %1766 = vmatprep.mubr.bf16.mxu0 0
    %1767 = vmatmul.mubr.bf16.gmra.mxu0 %v1732
    %v1768 = vpop.f32.mrf.mxu0
    %v1769 = vadd.f32 0.0, %v1768
    %v1770 = vpop.f32.mrf.mxu0
    %v1771 = vpop.f32.mrf.mxu0
    %v1772 = vadd.f32 0.0, %v1771
    %v1773 = vpop.f32.mrf.mxu0
    %1774 = vdwg.mxu0
    %v1775 = vadd.f32 %v1607, %v1769
    %v1776 = vadd.f32 %v1608, %v1772
    %v1777 = vadd.f32 %v1775, %v1102
    %v1778 = vadd.f32 %v1776, %v1102
    %s1779 = scalar_lea.vmem [#allocation17], 16
    %1780 = vst.msk [vmem:[%s1779] sm:$0xff] %vm197, %v1777
    %1781 = vst.msk [vmem:[%s1779 + $0x8] sm:$0xff] %vm197, %v1778
    // Predicated region
    $region82: #{tpu_custom_call.1} parent=1 // pred_check
      _
    $region83: #{tpu_custom_call.1} parent=1 // pred_check_branch
      %1783 = sbr.rel (0) target = $region85
    $region84: #{tpu_custom_call.1} parent=1 // pred_region
      %s1785 = ssub.s32 512, 512
      %1786 = vsyncadd [#allocation4], %s1785
      %s1787 = sshll.u32 [#allocation17], 4
      %s1788 = int_to_ptr.vmem [resolvable:$true] %s1787
      %1793 = dma.vmem_to_hbm [thread:$0]  %s1788, 512, %s11, [#allocation4], 128, 128, 8
    $region85: #{tpu_custom_call.1} parent=1 // pred_fallthru
      _
    // Predicated region
    $region86: #{tpu_custom_call.1} parent=1 // pred_check
      _
    $region87: #{tpu_custom_call.1} parent=1 // pred_check_branch
      %1795 = sbr.rel (0) target = $region89
    $region88: #{tpu_custom_call.1} parent=1 // pred_region
      %1796 = dma.done [#allocation4], 512
    $region89: #{tpu_custom_call.1} parent=1 // pred_fallthru
      _
    %1797 = vsyncpa [#allocation3], 1
    %1798 = vsyncpa [#allocation6], 1
    %1799 = vsyncpa [#allocation9], 1
    %1800 = vsyncpa [#allocation12], 1
    %1801 = vsyncpa [#allocation15], 1
    %1802 = vsyncpa [#allocation4], 1

</llo_original>
